<compile_context>
chip_gen: v7x
topology: tpu7x:2x2x1
jax: 0.10.0
libtpu: 0.0.40
codegen_flags: <defaults>
</compile_context>

<pallas_src>
import jax
import jax.numpy as jnp
from jax.experimental import pallas as pl
from jax.experimental.pallas import tpu as pltpu

# ----------------------------- configuration --------------------------------
B = 2
N_T, N_F, N_C = 16, 16, 1
N_S_I, N_S_O = 1, 2
ENCODED_DIMS = 32
HIDDEN_DIMS = (16,)
SQ = 4                                  # int(sqrt(hidden_dims[0])) -> 4x4 latent
UP = N_T // SQ                          # nearest-upsample factor (4)
DEC_CH = (N_S_O, 8, 8, N_S_O)           # decoder_channels
DTYPE = jnp.float32

LANES1 = N_F * DEC_CH[1]                # 128: conv1-out / conv2-in slab width
LANES2 = N_F * DEC_CH[2]                # 128: conv2-out / conv3-in slab width
LANES3 = N_F * DEC_CH[3]                # 32 : conv3-out (mask) slab width


# ----------------------------- fused Pallas kernel ---------------------------
def _fused_forward_kernel(x_ref, mix_ref,
                          enc_w_ref, enc_b_ref,
                          l1_w_ref, l1_b_ref,
                          l2_w_ref, l2_b_ref,
                          c1e_ref, c1b_ref,
                          c2w_ref, c2b_ref,
                          c3w_ref, c3b_ref,
                          out_ref, pad_ref):
    """One batch element per grid step; all intermediates stay in VMEM."""
    f32 = jnp.float32

    def dense_relu(v, w_ref, b_ref):
        y = jnp.dot(v, w_ref[...], preferred_element_type=f32) + b_ref[...]
        return jnp.maximum(y, 0.0)

    # ---- synthetic encoder (see TODO in init_params) + linear_1 / linear_2 --
    h = dense_relu(x_ref[0], enc_w_ref, enc_b_ref)        # (1, 32)
    h = dense_relu(h, l1_w_ref, l1_b_ref)                 # (1, 16)
    h = dense_relu(h, l2_w_ref, l2_b_ref)                 # (1, 32) torch (c,y,x) order

    # ---- conv1 (3x3 'same' on 4x4 latent) + ReLU + 4x nearest upsample ------
    # c1e[i] already contains conv1 *and* the f-direction upsample for latent
    # row i; the t-direction upsample is the 4-row broadcast store below.
    pad_ref[...] = jnp.zeros_like(pad_ref)                # also zeros t-halo rows
    for i in range(SQ):
        row = jnp.dot(h, c1e_ref[i], preferred_element_type=f32) + c1b_ref[...]
        row = jnp.maximum(row, 0.0)                       # (1, 128)
        pad_ref[1 + UP * i:1 + UP * (i + 1), :] = jnp.broadcast_to(row, (UP, LANES1))

    # ---- conv2 (3x3 'same') + ReLU: 3 row-shifted lane-dense matmuls --------
    # (f-direction shifts + zero padding are folded into the band matrices)
    p = pad_ref[...]                                      # (n_t + 2, 128)
    acc = jnp.zeros((N_T, LANES2), f32)
    for u in range(3):
        acc = acc + jnp.dot(p[u:u + N_T, :], c2w_ref[u],
                            preferred_element_type=f32)
    a2 = jnp.maximum(acc + c2b_ref[...], 0.0)             # (16, 128)
    # the second Upsample((n_t, n_f)) is the identity at these sizes -> dropped

    # ---- conv3 (3x3 'same') + Sigmoid, fused with estimates = mix * mask ----
    pad_ref[1:1 + N_T, :] = a2                            # reuse scratch; halo stays 0
    p = pad_ref[...]
    acc = jnp.zeros((N_T, LANES3), f32)
    for u in range(3):
        acc = acc + jnp.dot(p[u:u + N_T, :], c3w_ref[u],
                            preferred_element_type=f32)
    mask = jax.nn.sigmoid(acc + c3b_ref[...])             # (16, 32), col = f*n_s_o + s
    est = mix_ref[0] * mask                               # mixture pre-broadcast to same layout
    out_ref[0, :, :LANES3] = mask.astype(out_ref.dtype)
    out_ref[0, :, LANES3:] = est.astype(out_ref.dtype)


# ------------------- init-time weight repacking (not data path) --------------
def _band_conv_weights(w_torch, width, cin, cout, dtype=DTYPE):
    """Fold a 3x3 'same' conv's f-axis shifts + zero padding into 3 band matrices.

    w_torch: (cout, cin, 3, 3) torch Conv2d weight (cross-correlation).
    Returns W of shape (3, width*cin, width*cout) such that, with the activation
    stored as an (n_t+2, width*cin) slab (rows = t with a zero halo row on each
    side, cols = f*cin + c),
        conv_out = sum_u  slab[u:u+n_t, :] @ W[u]        (cols = f*cout + co).
    """
    k = jnp.transpose(w_torch.astype(dtype), (2, 3, 1, 0))     # (u, v, cin, cout)
    pidx = jnp.arange(width)[:, None]      # source f position (matrix rows)
    jidx = jnp.arange(width)[None, :]      # output f position (matrix cols)
    v = pidx - jidx + 1                    # which of the 3 f-taps connects p -> j
    valid = ((v >= 0) & (v <= 2)).astype(dtype)[..., None, None]
    vc = jnp.clip(v, 0, 2)
    mats = []
    for u in range(3):
        blk = k[u][vc] * valid                                  # (width, width, cin, cout)
        mats.append(jnp.transpose(blk, (0, 2, 1, 3)).reshape(width * cin, width * cout))
    return jnp.stack(mats)


def _dense_conv1_rows(w_torch, dtype=DTYPE):
    """Densify conv1 + the f-direction of the 4x nearest upsample (init only).

    Returns E of shape (SQ, DEC_CH[0]*SQ*SQ, N_F*DEC_CH[1]) = (4, 32, 128):
    E[i] maps the torch-ordered latent vector (index c*16 + y*4 + x, i.e. the
    linear_2 output after torch's reshape(B, n_s_o, 4, 4)) to the f-upsampled
    conv1 output row i (cols = f*cout + co), bias excluded.  Built by running
    the conv once on the 32-dim identity basis -- touches weights only.
    """
    cin, cout = DEC_CH[0], DEC_CH[1]
    kdim = cin * SQ * SQ
    eye = jnp.eye(kdim, dtype=dtype).reshape(kdim, cin, SQ, SQ)
    resp = jax.lax.conv_general_dilated(
        eye, w_torch.astype(dtype), window_strides=(1, 1), padding="SAME",
        dimension_numbers=("NCHW", "OIHW", "NCHW"))             # (32, cout, 4, 4)
    resp = jnp.transpose(resp, (0, 2, 3, 1))                    # (k, i, j, co)
    resp = jnp.repeat(resp, UP, axis=2)                         # (k, i, 16, co)
    resp = resp.reshape(kdim, SQ, N_F * cout)                   # (k, i, 128)
    return jnp.transpose(resp, (1, 0, 2))                       # (i, k, 128)


# ----------------------------- parameters ------------------------------------
def init_params(key):
    ks = jax.random.split(key, 11)
    s = 0.1
    kh, kw = 3, 3
    return {
        # TODO(synk): encoder_model is an external module passed into __init__;
        # stand in a deterministic synthetic linear+ReLU encoder producing
        # 'estimates' of width ENCODED_DIMS // N_S_I per example.
        "enc_w": s * jax.random.normal(ks[0], (N_T * N_F * N_C, ENCODED_DIMS // N_S_I), DTYPE),
        "enc_b": jnp.zeros((ENCODED_DIMS // N_S_I,), DTYPE),
        # decoder linears, stored as (in, out) weight + (out,) bias
        "lin1_w": s * jax.random.normal(ks[1], (ENCODED_DIMS, HIDDEN_DIMS[0]), DTYPE),
        "lin1_b": s * jax.random.normal(ks[2], (HIDDEN_DIMS[0],), DTYPE),
        "lin2_w": s * jax.random.normal(ks[3], (HIDDEN_DIMS[0], HIDDEN_DIMS[0] * N_S_O * N_C), DTYPE),
        "lin2_b": s * jax.random.normal(ks[4], (HIDDEN_DIMS[0] * N_S_O * N_C,), DTYPE),
        # conv weights in torch Conv2d layout (cout, cin, kh, kw)
        "conv1_w": s * jax.random.normal(ks[5], (DEC_CH[1], DEC_CH[0], kh, kw), DTYPE),
        "conv1_b": s * jax.random.normal(ks[6], (DEC_CH[1],), DTYPE),
        "conv2_w": s * jax.random.normal(ks[7], (DEC_CH[2], DEC_CH[1], kh, kw), DTYPE),
        "conv2_b": s * jax.random.normal(ks[8], (DEC_CH[2],), DTYPE),
        "conv3_w": s * jax.random.normal(ks[9], (DEC_CH[3], DEC_CH[2], kh, kw), DTYPE),
        "conv3_b": s * jax.random.normal(ks[10], (DEC_CH[3],), DTYPE),
    }


def prepare_params(p):
    """One-time repacking of torch-layout parameters into fused-kernel operands."""
    return {
        "enc_w": p["enc_w"], "enc_b": p["enc_b"][None, :],
        "l1_w": p["lin1_w"], "l1_b": p["lin1_b"][None, :],
        "l2_w": p["lin2_w"], "l2_b": p["lin2_b"][None, :],
        "c1_e": _dense_conv1_rows(p["conv1_w"]),                              # (4, 32, 128)
        "c1_b": jnp.tile(p["conv1_b"], N_F)[None, :],                         # (1, 128)
        "c2_w": _band_conv_weights(p["conv2_w"], N_F, DEC_CH[1], DEC_CH[2]),  # (3, 128, 128)
        "c2_b": jnp.tile(p["conv2_b"], N_F)[None, :],                         # (1, 128)
        "c3_w": _band_conv_weights(p["conv3_w"], N_F, DEC_CH[2], DEC_CH[3]),  # (3, 128, 32)
        "c3_b": jnp.tile(p["conv3_b"], N_F)[None, :],                         # (1, 32)
    }


# ----------------------------- forward pass -----------------------------------
@jax.jit
def cnn_autoencoder_forward(kp, x):
    """x (mix_magnitude): (B, n_t, n_f, n_c) float32; n_c must be 1 (required by
    the reference decoder's reshape)."""
    b, n_t, n_f, n_c = x.shape
    assert n_c == 1, "CNNDecoder reshape requires n_c == 1"

    # torch: unsqueeze(4) + repeat_interleave(repeats=1, dim=n_s_i) == identity,
    # then the (synthetic) encoder + reshape(-1, n_s_i * enc_dim); the flattening
    # is folded into the kernel's first matmul.
    x3d = x.reshape(b, 1, n_t * n_f * n_c)
    # mixture pre-broadcast to the kernel's mask layout (cols = f*n_s_o + s)
    mix_rep = jnp.repeat(x.reshape(b, n_t, n_f * n_c), N_S_O, axis=-1)

    def full_spec(shape):
        nd = len(shape)
        return pl.BlockSpec(shape, lambda i, _nd=nd: (0,) * _nd)

    in_specs = [
        pl.BlockSpec((1, 1, n_t * n_f * n_c), lambda i: (i, 0, 0)),
        pl.BlockSpec((1, n_t, n_f * N_S_O), lambda i: (i, 0, 0)),
        full_spec(kp["enc_w"].shape), full_spec(kp["enc_b"].shape),
        full_spec(kp["l1_w"].shape), full_spec(kp["l1_b"].shape),
        full_spec(kp["l2_w"].shape), full_spec(kp["l2_b"].shape),
        full_spec(kp["c1_e"].shape), full_spec(kp["c1_b"].shape),
        full_spec(kp["c2_w"].shape), full_spec(kp["c2_b"].shape),
        full_spec(kp["c3_w"].shape), full_spec(kp["c3_b"].shape),
    ]
    out_specs = pl.BlockSpec((1, n_t, 2 * N_S_O * n_f), lambda i: (i, 0, 0))

    out = pl.pallas_call(
        _fused_forward_kernel,
        out_shape=jax.ShapeDtypeStruct((b, n_t, 2 * N_S_O * n_f), x.dtype),
        grid=(b,),
        in_specs=in_specs,
        out_specs=out_specs,
        scratch_shapes=[pltpu.VMEM((n_t + 2, N_F * DEC_CH[1]), jnp.float32)],
        compiler_params=pltpu.CompilerParams(dimension_semantics=("parallel",)),
    )(x3d, mix_rep,
      kp["enc_w"], kp["enc_b"], kp["l1_w"], kp["l1_b"], kp["l2_w"], kp["l2_b"],
      kp["c1_e"], kp["c1_b"], kp["c2_w"], kp["c2_b"], kp["c3_w"], kp["c3_b"])

    # lane-dense output slab -> torch permute(0,3,4,2,1) layout (B, n_t, n_f, 1, n_s_o)
    half = N_S_O * n_f
    mask = out[..., :half].reshape(b, n_t, n_f, 1, N_S_O)
    estimates = out[..., half:].reshape(b, n_t, n_f, 1, N_S_O)
    return {"mask": mask, "estimates": estimates}


# ----------------------------- main -------------------------------------------
if __name__ == "__main__":
    key = jax.random.PRNGKey(0)
    pkey, xkey = jax.random.split(key)
    params = init_params(pkey)
    kparams = prepare_params(params)       # one-time weight repacking

    # mix_magnitude: (B, n_t, n_f, n_c), non-negative like a magnitude spectrogram
    x = jnp.abs(jax.random.normal(xkey, (B, N_T, N_F, N_C), DTYPE))

    out = cnn_autoencoder_forward(kparams, x)
    jax.block_until_ready(out)

    assert out["mask"].shape == (B, N_T, N_F, 1, N_S_O)
    assert out["estimates"].shape == (B, N_T, N_F, 1, N_S_O)
    assert bool(jnp.all(jnp.isfinite(out["mask"])))
    assert bool(jnp.all(jnp.isfinite(out["estimates"])))
    assert bool(jnp.all((out["mask"] >= 0.0) & (out["mask"] <= 1.0)))
    print("KERNEL_OK")
</pallas_src>

<mosaic_0001>
module attributes {stable_mosaic.version = 11 : i64} {
  func.func @_fused_forward_kernel(%arg0: i32, %arg1: memref<1x1x256xf32, #tpu.memory_space<vmem>>, %arg2: memref<1x16x32xf32, #tpu.memory_space<vmem>>, %arg3: memref<256x32xf32, #tpu.memory_space<vmem>>, %arg4: memref<1x32xf32, #tpu.memory_space<vmem>>, %arg5: memref<32x16xf32, #tpu.memory_space<vmem>>, %arg6: memref<1x16xf32, #tpu.memory_space<vmem>>, %arg7: memref<16x32xf32, #tpu.memory_space<vmem>>, %arg8: memref<1x32xf32, #tpu.memory_space<vmem>>, %arg9: memref<4x32x128xf32, #tpu.memory_space<vmem>>, %arg10: memref<1x128xf32, #tpu.memory_space<vmem>>, %arg11: memref<3x128x128xf32, #tpu.memory_space<vmem>>, %arg12: memref<1x128xf32, #tpu.memory_space<vmem>>, %arg13: memref<3x128x32xf32, #tpu.memory_space<vmem>>, %arg14: memref<1x32xf32, #tpu.memory_space<vmem>>, %arg15: memref<1x16x64xf32, #tpu.memory_space<vmem>>, %arg16: memref<18x128xf32, #tpu.memory_space<vmem>>) attributes {dimension_semantics = [#tpu.dimension_semantics<parallel>], iteration_bounds = array<i64: 2>, scalar_prefetch = 0 : i64, scratch_operands = 1 : i64, tpu.core_type = #tpu.core_type<tc>, window_params = [{transform_indices = @transform_0, window_bounds = array<i64: 1, 1, 256>}, {transform_indices = @transform_1, window_bounds = array<i64: 1, 16, 32>}, {pipeline_mode = #tpu.pipeline_mode<synchronous>, transform_indices = @transform_2, window_bounds = array<i64: 256, 32>}, {pipeline_mode = #tpu.pipeline_mode<synchronous>, transform_indices = @transform_3, window_bounds = array<i64: 1, 32>}, {pipeline_mode = #tpu.pipeline_mode<synchronous>, transform_indices = @transform_4, window_bounds = array<i64: 32, 16>}, {pipeline_mode = #tpu.pipeline_mode<synchronous>, transform_indices = @transform_5, window_bounds = array<i64: 1, 16>}, {pipeline_mode = #tpu.pipeline_mode<synchronous>, transform_indices = @transform_6, window_bounds = array<i64: 16, 32>}, {pipeline_mode = #tpu.pipeline_mode<synchronous>, transform_indices = @transform_7, window_bounds = array<i64: 1, 32>}, {pipeline_mode = #tpu.pipeline_mode<synchronous>, transform_indices = @transform_8, window_bounds = array<i64: 4, 32, 128>}, {pipeline_mode = #tpu.pipeline_mode<synchronous>, transform_indices = @transform_9, window_bounds = array<i64: 1, 128>}, {pipeline_mode = #tpu.pipeline_mode<synchronous>, transform_indices = @transform_10, window_bounds = array<i64: 3, 128, 128>}, {pipeline_mode = #tpu.pipeline_mode<synchronous>, transform_indices = @transform_11, window_bounds = array<i64: 1, 128>}, {pipeline_mode = #tpu.pipeline_mode<synchronous>, transform_indices = @transform_12, window_bounds = array<i64: 3, 128, 32>}, {pipeline_mode = #tpu.pipeline_mode<synchronous>, transform_indices = @transform_13, window_bounds = array<i64: 1, 32>}, {transform_indices = @transform_14, window_bounds = array<i64: 1, 16, 64>}]} {
    %c0 = arith.constant 0 : index
    %c0_0 = arith.constant 0 : index
    %c0_1 = arith.constant 0 : index
    %0 = vector.load %arg1[%c0, %c0_0, %c0_1] : memref<1x1x256xf32, #tpu.memory_space<vmem>>, vector<1x1x256xf32>
    %1 = vector.shape_cast %0 : vector<1x1x256xf32> to vector<1x256xf32>
    %c0_2 = arith.constant 0 : index
    %c0_3 = arith.constant 0 : index
    %2 = vector.load %arg3[%c0_2, %c0_3] : memref<256x32xf32, #tpu.memory_space<vmem>>, vector<256x32xf32>
    %cst = arith.constant dense<0.000000e+00> : vector<1x32xf32>
    %3 = tpu.matmul %1, %2, %cst {dimension_numbers = #tpu.dot_dimension_numbers<[1], [0], [0], [1], [0, 0, 1, 1], [], []>} : vector<1x256xf32>, vector<256x32xf32>, vector<1x32xf32> -> vector<1x32xf32>
    %c0_4 = arith.constant 0 : index
    %c0_5 = arith.constant 0 : index
    %4 = vector.load %arg4[%c0_4, %c0_5] : memref<1x32xf32, #tpu.memory_space<vmem>>, vector<1x32xf32>
    %5 = arith.addf %3, %4 : vector<1x32xf32>
    %cst_6 = arith.constant 0.000000e+00 : f32
    %6 = vector.broadcast %cst_6 : f32 to vector<1x32xf32>
    %7 = arith.maximumf %5, %6 : vector<1x32xf32>
    %c0_7 = arith.constant 0 : index
    %c0_8 = arith.constant 0 : index
    %8 = vector.load %arg5[%c0_7, %c0_8] : memref<32x16xf32, #tpu.memory_space<vmem>>, vector<32x16xf32>
    %cst_9 = arith.constant dense<0.000000e+00> : vector<1x16xf32>
    %9 = tpu.matmul %7, %8, %cst_9 {dimension_numbers = #tpu.dot_dimension_numbers<[1], [0], [0], [1], [0, 0, 1, 1], [], []>} : vector<1x32xf32>, vector<32x16xf32>, vector<1x16xf32> -> vector<1x16xf32>
    %c0_10 = arith.constant 0 : index
    %c0_11 = arith.constant 0 : index
    %10 = vector.load %arg6[%c0_10, %c0_11] : memref<1x16xf32, #tpu.memory_space<vmem>>, vector<1x16xf32>
    %11 = arith.addf %9, %10 : vector<1x16xf32>
    %cst_12 = arith.constant 0.000000e+00 : f32
    %12 = vector.broadcast %cst_12 : f32 to vector<1x16xf32>
    %13 = arith.maximumf %11, %12 : vector<1x16xf32>
    %c0_13 = arith.constant 0 : index
    %c0_14 = arith.constant 0 : index
    %14 = vector.load %arg7[%c0_13, %c0_14] : memref<16x32xf32, #tpu.memory_space<vmem>>, vector<16x32xf32>
    %cst_15 = arith.constant dense<0.000000e+00> : vector<1x32xf32>
    %15 = tpu.matmul %13, %14, %cst_15 {dimension_numbers = #tpu.dot_dimension_numbers<[1], [0], [0], [1], [0, 0, 1, 1], [], []>} : vector<1x16xf32>, vector<16x32xf32>, vector<1x32xf32> -> vector<1x32xf32>
    %c0_16 = arith.constant 0 : index
    %c0_17 = arith.constant 0 : index
    %16 = vector.load %arg8[%c0_16, %c0_17] : memref<1x32xf32, #tpu.memory_space<vmem>>, vector<1x32xf32>
    %17 = arith.addf %15, %16 : vector<1x32xf32>
    %cst_18 = arith.constant 0.000000e+00 : f32
    %18 = vector.broadcast %cst_18 : f32 to vector<1x32xf32>
    %19 = arith.maximumf %17, %18 : vector<1x32xf32>
    %cst_19 = arith.constant 0.000000e+00 : f32
    %20 = vector.broadcast %cst_19 : f32 to vector<18x128xf32>
    %c0_20 = arith.constant 0 : index
    %c0_21 = arith.constant 0 : index
    %21 = vector.load %arg16[%c0_20, %c0_21] : memref<18x128xf32, #tpu.memory_space<vmem>>, vector<18x128xf32>
    tpu.vector_store %arg16[%c0_20, %c0_21], %20 {strides = array<i32>} : memref<18x128xf32, #tpu.memory_space<vmem>>, vector<18x128xf32>,
    %c0_22 = arith.constant 0 : index
    %c0_23 = arith.constant 0 : index
    %c0_24 = arith.constant 0 : index
    %22 = vector.load %arg9[%c0_22, %c0_23, %c0_24] : memref<4x32x128xf32, #tpu.memory_space<vmem>>, vector<1x32x128xf32>
    %23 = vector.shape_cast %22 : vector<1x32x128xf32> to vector<32x128xf32>
    %cst_25 = arith.constant dense<0.000000e+00> : vector<1x128xf32>
    %24 = tpu.matmul %19, %23, %cst_25 {dimension_numbers = #tpu.dot_dimension_numbers<[1], [0], [0], [1], [0, 0, 1, 1], [], []>} : vector<1x32xf32>, vector<32x128xf32>, vector<1x128xf32> -> vector<1x128xf32>
    %c0_26 = arith.constant 0 : index
    %c0_27 = arith.constant 0 : index
    %25 = vector.load %arg10[%c0_26, %c0_27] : memref<1x128xf32, #tpu.memory_space<vmem>>, vector<1x128xf32>
    %26 = arith.addf %24, %25 : vector<1x128xf32>
    %cst_28 = arith.constant 0.000000e+00 : f32
    %27 = vector.broadcast %cst_28 : f32 to vector<1x128xf32>
    %28 = arith.maximumf %26, %27 : vector<1x128xf32>
    %29 = vector.shape_cast %28 : vector<1x128xf32> to vector<1x128xf32>
    %30 = vector.broadcast %29 : vector<1x128xf32> to vector<4x128xf32>
    %c1 = arith.constant 1 : index
    %c0_29 = arith.constant 0 : index
    %31 = vector.load %arg16[%c1, %c0_29] : memref<18x128xf32, #tpu.memory_space<vmem>>, vector<4x128xf32>
    tpu.vector_store %arg16[%c1, %c0_29], %30 {strides = array<i32>} : memref<18x128xf32, #tpu.memory_space<vmem>>, vector<4x128xf32>,
    %c1_30 = arith.constant 1 : index
    %c0_31 = arith.constant 0 : index
    %c0_32 = arith.constant 0 : index
    %32 = vector.load %arg9[%c1_30, %c0_31, %c0_32] : memref<4x32x128xf32, #tpu.memory_space<vmem>>, vector<1x32x128xf32>
    %33 = vector.shape_cast %32 : vector<1x32x128xf32> to vector<32x128xf32>
    %cst_33 = arith.constant dense<0.000000e+00> : vector<1x128xf32>
    %34 = tpu.matmul %19, %33, %cst_33 {dimension_numbers = #tpu.dot_dimension_numbers<[1], [0], [0], [1], [0, 0, 1, 1], [], []>} : vector<1x32xf32>, vector<32x128xf32>, vector<1x128xf32> -> vector<1x128xf32>
    %c0_34 = arith.constant 0 : index
    %c0_35 = arith.constant 0 : index
    %35 = vector.load %arg10[%c0_34, %c0_35] : memref<1x128xf32, #tpu.memory_space<vmem>>, vector<1x128xf32>
    %36 = arith.addf %34, %35 : vector<1x128xf32>
    %cst_36 = arith.constant 0.000000e+00 : f32
    %37 = vector.broadcast %cst_36 : f32 to vector<1x128xf32>
    %38 = arith.maximumf %36, %37 : vector<1x128xf32>
    %39 = vector.shape_cast %38 : vector<1x128xf32> to vector<1x128xf32>
    %40 = vector.broadcast %39 : vector<1x128xf32> to vector<4x128xf32>
    %c5 = arith.constant 5 : index
    %c0_37 = arith.constant 0 : index
    %41 = vector.load %arg16[%c5, %c0_37] : memref<18x128xf32, #tpu.memory_space<vmem>>, vector<4x128xf32>
    tpu.vector_store %arg16[%c5, %c0_37], %40 {strides = array<i32>} : memref<18x128xf32, #tpu.memory_space<vmem>>, vector<4x128xf32>,
    %c2 = arith.constant 2 : index
    %c0_38 = arith.constant 0 : index
    %c0_39 = arith.constant 0 : index
    %42 = vector.load %arg9[%c2, %c0_38, %c0_39] : memref<4x32x128xf32, #tpu.memory_space<vmem>>, vector<1x32x128xf32>
    %43 = vector.shape_cast %42 : vector<1x32x128xf32> to vector<32x128xf32>
    %cst_40 = arith.constant dense<0.000000e+00> : vector<1x128xf32>
    %44 = tpu.matmul %19, %43, %cst_40 {dimension_numbers = #tpu.dot_dimension_numbers<[1], [0], [0], [1], [0, 0, 1, 1], [], []>} : vector<1x32xf32>, vector<32x128xf32>, vector<1x128xf32> -> vector<1x128xf32>
    %c0_41 = arith.constant 0 : index
    %c0_42 = arith.constant 0 : index
    %45 = vector.load %arg10[%c0_41, %c0_42] : memref<1x128xf32, #tpu.memory_space<vmem>>, vector<1x128xf32>
    %46 = arith.addf %44, %45 : vector<1x128xf32>
    %cst_43 = arith.constant 0.000000e+00 : f32
    %47 = vector.broadcast %cst_43 : f32 to vector<1x128xf32>
    %48 = arith.maximumf %46, %47 : vector<1x128xf32>
    %49 = vector.shape_cast %48 : vector<1x128xf32> to vector<1x128xf32>
    %50 = vector.broadcast %49 : vector<1x128xf32> to vector<4x128xf32>
    %c9 = arith.constant 9 : index
    %c0_44 = arith.constant 0 : index
    %51 = vector.load %arg16[%c9, %c0_44] : memref<18x128xf32, #tpu.memory_space<vmem>>, vector<4x128xf32>
    tpu.vector_store %arg16[%c9, %c0_44], %50 {strides = array<i32>} : memref<18x128xf32, #tpu.memory_space<vmem>>, vector<4x128xf32>,
    %c3 = arith.constant 3 : index
    %c0_45 = arith.constant 0 : index
    %c0_46 = arith.constant 0 : index
    %52 = vector.load %arg9[%c3, %c0_45, %c0_46] : memref<4x32x128xf32, #tpu.memory_space<vmem>>, vector<1x32x128xf32>
    %53 = vector.shape_cast %52 : vector<1x32x128xf32> to vector<32x128xf32>
    %cst_47 = arith.constant dense<0.000000e+00> : vector<1x128xf32>
    %54 = tpu.matmul %19, %53, %cst_47 {dimension_numbers = #tpu.dot_dimension_numbers<[1], [0], [0], [1], [0, 0, 1, 1], [], []>} : vector<1x32xf32>, vector<32x128xf32>, vector<1x128xf32> -> vector<1x128xf32>
    %c0_48 = arith.constant 0 : index
    %c0_49 = arith.constant 0 : index
    %55 = vector.load %arg10[%c0_48, %c0_49] : memref<1x128xf32, #tpu.memory_space<vmem>>, vector<1x128xf32>
    %56 = arith.addf %54, %55 : vector<1x128xf32>
    %cst_50 = arith.constant 0.000000e+00 : f32
    %57 = vector.broadcast %cst_50 : f32 to vector<1x128xf32>
    %58 = arith.maximumf %56, %57 : vector<1x128xf32>
    %59 = vector.shape_cast %58 : vector<1x128xf32> to vector<1x128xf32>
    %60 = vector.broadcast %59 : vector<1x128xf32> to vector<4x128xf32>
    %c13 = arith.constant 13 : index
    %c0_51 = arith.constant 0 : index
    %61 = vector.load %arg16[%c13, %c0_51] : memref<18x128xf32, #tpu.memory_space<vmem>>, vector<4x128xf32>
    tpu.vector_store %arg16[%c13, %c0_51], %60 {strides = array<i32>} : memref<18x128xf32, #tpu.memory_space<vmem>>, vector<4x128xf32>,
    %c0_52 = arith.constant 0 : index
    %c0_53 = arith.constant 0 : index
    %62 = vector.load %arg16[%c0_52, %c0_53] : memref<18x128xf32, #tpu.memory_space<vmem>>, vector<18x128xf32>
    %cst_54 = arith.constant 0.000000e+00 : f32
    %63 = vector.broadcast %cst_54 : f32 to vector<16x128xf32>
    %64 = vector.extract_strided_slice %62 {offsets = [0, 0], sizes = [16, 128], strides = [1, 1]} : vector<18x128xf32> to vector<16x128xf32>
    %c0_55 = arith.constant 0 : index
    %c0_56 = arith.constant 0 : index
    %c0_57 = arith.constant 0 : index
    %65 = vector.load %arg11[%c0_55, %c0_56, %c0_57] : memref<3x128x128xf32, #tpu.memory_space<vmem>>, vector<1x128x128xf32>
    %66 = vector.shape_cast %65 : vector<1x128x128xf32> to vector<128x128xf32>
    %cst_58 = arith.constant dense<0.000000e+00> : vector<16x128xf32>
    %67 = tpu.matmul %64, %66, %cst_58 {dimension_numbers = #tpu.dot_dimension_numbers<[1], [0], [0], [1], [0, 0, 1, 1], [], []>} : vector<16x128xf32>, vector<128x128xf32>, vector<16x128xf32> -> vector<16x128xf32>
    %68 = arith.addf %63, %67 : vector<16x128xf32>
    %69 = vector.extract_strided_slice %62 {offsets = [1, 0], sizes = [16, 128], strides = [1, 1]} : vector<18x128xf32> to vector<16x128xf32>
    %c1_59 = arith.constant 1 : index
    %c0_60 = arith.constant 0 : index
    %c0_61 = arith.constant 0 : index
    %70 = vector.load %arg11[%c1_59, %c0_60, %c0_61] : memref<3x128x128xf32, #tpu.memory_space<vmem>>, vector<1x128x128xf32>
    %71 = vector.shape_cast %70 : vector<1x128x128xf32> to vector<128x128xf32>
    %cst_62 = arith.constant dense<0.000000e+00> : vector<16x128xf32>
    %72 = tpu.matmul %69, %71, %cst_62 {dimension_numbers = #tpu.dot_dimension_numbers<[1], [0], [0], [1], [0, 0, 1, 1], [], []>} : vector<16x128xf32>, vector<128x128xf32>, vector<16x128xf32> -> vector<16x128xf32>
    %73 = arith.addf %68, %72 : vector<16x128xf32>
    %74 = vector.extract_strided_slice %62 {offsets = [2, 0], sizes = [16, 128], strides = [1, 1]} : vector<18x128xf32> to vector<16x128xf32>
    %c2_63 = arith.constant 2 : index
    %c0_64 = arith.constant 0 : index
    %c0_65 = arith.constant 0 : index
    %75 = vector.load %arg11[%c2_63, %c0_64, %c0_65] : memref<3x128x128xf32, #tpu.memory_space<vmem>>, vector<1x128x128xf32>
    %76 = vector.shape_cast %75 : vector<1x128x128xf32> to vector<128x128xf32>
    %cst_66 = arith.constant dense<0.000000e+00> : vector<16x128xf32>
    %77 = tpu.matmul %74, %76, %cst_66 {dimension_numbers = #tpu.dot_dimension_numbers<[1], [0], [0], [1], [0, 0, 1, 1], [], []>} : vector<16x128xf32>, vector<128x128xf32>, vector<16x128xf32> -> vector<16x128xf32>
    %78 = arith.addf %73, %77 : vector<16x128xf32>
    %c0_67 = arith.constant 0 : index
    %c0_68 = arith.constant 0 : index
    %79 = vector.load %arg12[%c0_67, %c0_68] : memref<1x128xf32, #tpu.memory_space<vmem>>, vector<1x128xf32>
    %80 = vector.broadcast %79 : vector<1x128xf32> to vector<16x128xf32>
    %81 = arith.addf %78, %80 : vector<16x128xf32>
    %cst_69 = arith.constant 0.000000e+00 : f32
    %82 = vector.broadcast %cst_69 : f32 to vector<16x128xf32>
    %83 = arith.maximumf %81, %82 : vector<16x128xf32>
    %c1_70 = arith.constant 1 : index
    %c0_71 = arith.constant 0 : index
    %84 = vector.load %arg16[%c1_70, %c0_71] : memref<18x128xf32, #tpu.memory_space<vmem>>, vector<16x128xf32>
    tpu.vector_store %arg16[%c1_70, %c0_71], %83 {strides = array<i32>} : memref<18x128xf32, #tpu.memory_space<vmem>>, vector<16x128xf32>,
    %c0_72 = arith.constant 0 : index
    %c0_73 = arith.constant 0 : index
    %85 = vector.load %arg16[%c0_72, %c0_73] : memref<18x128xf32, #tpu.memory_space<vmem>>, vector<18x128xf32>
    %cst_74 = arith.constant 0.000000e+00 : f32
    %86 = vector.broadcast %cst_74 : f32 to vector<16x32xf32>
    %87 = vector.extract_strided_slice %85 {offsets = [0, 0], sizes = [16, 128], strides = [1, 1]} : vector<18x128xf32> to vector<16x128xf32>
    %c0_75 = arith.constant 0 : index
    %c0_76 = arith.constant 0 : index
    %c0_77 = arith.constant 0 : index
    %88 = vector.load %arg13[%c0_75, %c0_76, %c0_77] : memref<3x128x32xf32, #tpu.memory_space<vmem>>, vector<1x128x32xf32>
    %89 = vector.shape_cast %88 : vector<1x128x32xf32> to vector<128x32xf32>
    %cst_78 = arith.constant dense<0.000000e+00> : vector<16x32xf32>
    %90 = tpu.matmul %87, %89, %cst_78 {dimension_numbers = #tpu.dot_dimension_numbers<[1], [0], [0], [1], [0, 0, 1, 1], [], []>} : vector<16x128xf32>, vector<128x32xf32>, vector<16x32xf32> -> vector<16x32xf32>
    %91 = arith.addf %86, %90 : vector<16x32xf32>
    %92 = vector.extract_strided_slice %85 {offsets = [1, 0], sizes = [16, 128], strides = [1, 1]} : vector<18x128xf32> to vector<16x128xf32>
    %c1_79 = arith.constant 1 : index
    %c0_80 = arith.constant 0 : index
    %c0_81 = arith.constant 0 : index
    %93 = vector.load %arg13[%c1_79, %c0_80, %c0_81] : memref<3x128x32xf32, #tpu.memory_space<vmem>>, vector<1x128x32xf32>
    %94 = vector.shape_cast %93 : vector<1x128x32xf32> to vector<128x32xf32>
    %cst_82 = arith.constant dense<0.000000e+00> : vector<16x32xf32>
    %95 = tpu.matmul %92, %94, %cst_82 {dimension_numbers = #tpu.dot_dimension_numbers<[1], [0], [0], [1], [0, 0, 1, 1], [], []>} : vector<16x128xf32>, vector<128x32xf32>, vector<16x32xf32> -> vector<16x32xf32>
    %96 = arith.addf %91, %95 : vector<16x32xf32>
    %97 = vector.extract_strided_slice %85 {offsets = [2, 0], sizes = [16, 128], strides = [1, 1]} : vector<18x128xf32> to vector<16x128xf32>
    %c2_83 = arith.constant 2 : index
    %c0_84 = arith.constant 0 : index
    %c0_85 = arith.constant 0 : index
    %98 = vector.load %arg13[%c2_83, %c0_84, %c0_85] : memref<3x128x32xf32, #tpu.memory_space<vmem>>, vector<1x128x32xf32>
    %99 = vector.shape_cast %98 : vector<1x128x32xf32> to vector<128x32xf32>
    %cst_86 = arith.constant dense<0.000000e+00> : vector<16x32xf32>
    %100 = tpu.matmul %97, %99, %cst_86 {dimension_numbers = #tpu.dot_dimension_numbers<[1], [0], [0], [1], [0, 0, 1, 1], [], []>} : vector<16x128xf32>, vector<128x32xf32>, vector<16x32xf32> -> vector<16x32xf32>
    %101 = arith.addf %96, %100 : vector<16x32xf32>
    %c0_87 = arith.constant 0 : index
    %c0_88 = arith.constant 0 : index
    %102 = vector.load %arg14[%c0_87, %c0_88] : memref<1x32xf32, #tpu.memory_space<vmem>>, vector<1x32xf32>
    %103 = vector.broadcast %102 : vector<1x32xf32> to vector<16x32xf32>
    %104 = arith.addf %101, %103 : vector<16x32xf32>
    %105 = arith.negf %104 : vector<16x32xf32>
    %106 = math.exp %105 : vector<16x32xf32>
    %cst_89 = arith.constant 1.000000e+00 : f32
    %107 = vector.broadcast %cst_89 : f32 to vector<16x32xf32>
    %108 = arith.addf %107, %106 : vector<16x32xf32>
    %109 = arith.divf %107, %108 : vector<16x32xf32>
    %c0_90 = arith.constant 0 : index
    %c0_91 = arith.constant 0 : index
    %c0_92 = arith.constant 0 : index
    %110 = vector.load %arg2[%c0_90, %c0_91, %c0_92] : memref<1x16x32xf32, #tpu.memory_space<vmem>>, vector<1x16x32xf32>
    %111 = vector.shape_cast %110 : vector<1x16x32xf32> to vector<16x32xf32>
    %112 = arith.mulf %111, %109 : vector<16x32xf32>
    %c0_93 = arith.constant 0 : index
    %c0_94 = arith.constant 0 : index
    %c0_95 = arith.constant 0 : index
    %113 = vector.load %arg15[%c0_93, %c0_94, %c0_95] : memref<1x16x64xf32, #tpu.memory_space<vmem>>, vector<1x16x32xf32>
    %114 = vector.shape_cast %113 : vector<1x16x32xf32> to vector<16x32xf32>
    %115 = vector.shape_cast %109 : vector<16x32xf32> to vector<1x16x32xf32>
    tpu.vector_store %arg15[%c0_93, %c0_94, %c0_95], %115 {strides = array<i32>} : memref<1x16x64xf32, #tpu.memory_space<vmem>>, vector<1x16x32xf32>,
    %c0_96 = arith.constant 0 : index
    %c0_97 = arith.constant 0 : index
    %c32 = arith.constant 32 : index
    %116 = vector.load %arg15[%c0_96, %c0_97, %c32] : memref<1x16x64xf32, #tpu.memory_space<vmem>>, vector<1x16x32xf32>
    %117 = vector.shape_cast %116 : vector<1x16x32xf32> to vector<16x32xf32>
    %118 = vector.shape_cast %112 : vector<16x32xf32> to vector<1x16x32xf32>
    tpu.vector_store %arg15[%c0_96, %c0_97, %c32], %118 {strides = array<i32>} : memref<1x16x64xf32, #tpu.memory_space<vmem>>, vector<1x16x32xf32>,
    return
  }
  func.func @transform_0(%arg0: i32) -> (i32, i32, i32) {
    %c0_i32 = arith.constant 0 : i32
    %c0_i32_0 = arith.constant 0 : i32
    %c0_i32_1 = arith.constant 0 : i32
    return %arg0, %c0_i32, %c0_i32_0 : i32, i32, i32
  }
  func.func @transform_1(%arg0: i32) -> (i32, i32, i32) {
    %c0_i32 = arith.constant 0 : i32
    %c0_i32_0 = arith.constant 0 : i32
    %c0_i32_1 = arith.constant 0 : i32
    return %arg0, %c0_i32, %c0_i32_0 : i32, i32, i32
  }
  func.func @transform_2(%arg0: i32) -> (i32, i32) {
    %c0_i32 = arith.constant 0 : i32
    %c0_i32_0 = arith.constant 0 : i32
    %c0_i32_1 = arith.constant 0 : i32
    return %c0_i32, %c0_i32_0 : i32, i32
  }
  func.func @transform_3(%arg0: i32) -> (i32, i32) {
    %c0_i32 = arith.constant 0 : i32
    %c0_i32_0 = arith.constant 0 : i32
    %c0_i32_1 = arith.constant 0 : i32
    return %c0_i32, %c0_i32_0 : i32, i32
  }
  func.func @transform_4(%arg0: i32) -> (i32, i32) {
    %c0_i32 = arith.constant 0 : i32
    %c0_i32_0 = arith.constant 0 : i32
    %c0_i32_1 = arith.constant 0 : i32
    return %c0_i32, %c0_i32_0 : i32, i32
  }
  func.func @transform_5(%arg0: i32) -> (i32, i32) {
    %c0_i32 = arith.constant 0 : i32
    %c0_i32_0 = arith.constant 0 : i32
    %c0_i32_1 = arith.constant 0 : i32
    return %c0_i32, %c0_i32_0 : i32, i32
  }
  func.func @transform_6(%arg0: i32) -> (i32, i32) {
    %c0_i32 = arith.constant 0 : i32
    %c0_i32_0 = arith.constant 0 : i32
    %c0_i32_1 = arith.constant 0 : i32
    return %c0_i32, %c0_i32_0 : i32, i32
  }
  func.func @transform_7(%arg0: i32) -> (i32, i32) {
    %c0_i32 = arith.constant 0 : i32
    %c0_i32_0 = arith.constant 0 : i32
    %c0_i32_1 = arith.constant 0 : i32
    return %c0_i32, %c0_i32_0 : i32, i32
  }
  func.func @transform_8(%arg0: i32) -> (i32, i32, i32) {
    %c0_i32 = arith.constant 0 : i32
    %c0_i32_0 = arith.constant 0 : i32
    %c0_i32_1 = arith.constant 0 : i32
    %c0_i32_2 = arith.constant 0 : i32
    return %c0_i32, %c0_i32_0, %c0_i32_1 : i32, i32, i32
  }
  func.func @transform_9(%arg0: i32) -> (i32, i32) {
    %c0_i32 = arith.constant 0 : i32
    %c0_i32_0 = arith.constant 0 : i32
    %c0_i32_1 = arith.constant 0 : i32
    return %c0_i32, %c0_i32_0 : i32, i32
  }
  func.func @transform_10(%arg0: i32) -> (i32, i32, i32) {
    %c0_i32 = arith.constant 0 : i32
    %c0_i32_0 = arith.constant 0 : i32
    %c0_i32_1 = arith.constant 0 : i32
    %c0_i32_2 = arith.constant 0 : i32
    return %c0_i32, %c0_i32_0, %c0_i32_1 : i32, i32, i32
  }
  func.func @transform_11(%arg0: i32) -> (i32, i32) {
    %c0_i32 = arith.constant 0 : i32
    %c0_i32_0 = arith.constant 0 : i32
    %c0_i32_1 = arith.constant 0 : i32
    return %c0_i32, %c0_i32_0 : i32, i32
  }
  func.func @transform_12(%arg0: i32) -> (i32, i32, i32) {
    %c0_i32 = arith.constant 0 : i32
    %c0_i32_0 = arith.constant 0 : i32
    %c0_i32_1 = arith.constant 0 : i32
    %c0_i32_2 = arith.constant 0 : i32
    return %c0_i32, %c0_i32_0, %c0_i32_1 : i32, i32, i32
  }
  func.func @transform_13(%arg0: i32) -> (i32, i32) {
    %c0_i32 = arith.constant 0 : i32
    %c0_i32_0 = arith.constant 0 : i32
    %c0_i32_1 = arith.constant 0 : i32
    return %c0_i32, %c0_i32_0 : i32, i32
  }
  func.func @transform_14(%arg0: i32) -> (i32, i32, i32) {
    %c0_i32 = arith.constant 0 : i32
    %c0_i32_0 = arith.constant 0 : i32
    %c0_i32_1 = arith.constant 0 : i32
    return %arg0, %c0_i32, %c0_i32_0 : i32, i32, i32
  }
}

</mosaic_0001>

<llo_original>
// kernel: cnn_autoencoder_forward.1
$region0: #{cnn_autoencoder_forward.1}
  #allocation0 [shape = 'u32[]', space=smem, size = 0x4, offset = 0x4, fixed_abs, tag = 'smem constant byte address 0x4 - core index']
  #allocation1 [shape = 'u32[144,128]{1,0:T(1,128)}', space=vmem, size = 0x12000, scoped, tag = 'internal scratch']
  #allocation2 [shape = 'f32[18,128]{1,0:T(8,128)}', space=vmem, size = 0x3000, scoped, tag = 'scratch operand']
  %s0 = inlined_call_operand.vmem [shape: f32[2,1,256], index: 0, kind: input, shape index: {}]
  %s1 = inlined_call_operand.vmem [shape: f32[2,16,32], index: 1, kind: input, shape index: {}]
  %s2 = inlined_call_operand.vmem [shape: f32[256,32], index: 2, kind: input, shape index: {}]
  %s3 = inlined_call_operand.vmem [shape: f32[1,32], index: 3, kind: input, shape index: {}]
  %s4 = inlined_call_operand.vmem [shape: f32[32,16], index: 4, kind: input, shape index: {}]
  %s5 = inlined_call_operand.vmem [shape: f32[1,16], index: 5, kind: input, shape index: {}]
  %s6 = inlined_call_operand.vmem [shape: f32[16,32], index: 6, kind: input, shape index: {}]
  %s7 = inlined_call_operand.vmem [shape: f32[1,32], index: 7, kind: input, shape index: {}]
  %s8 = inlined_call_operand.vmem [shape: f32[4,32,128], index: 8, kind: input, shape index: {}]
  %s9 = inlined_call_operand.vmem [shape: f32[1,128], index: 9, kind: input, shape index: {}]
  %s10 = inlined_call_operand.vmem [shape: f32[3,128,128], index: 10, kind: input, shape index: {}]
  %s11 = inlined_call_operand.vmem [shape: f32[1,128], index: 11, kind: input, shape index: {}]
  %s12 = inlined_call_operand.vmem [shape: f32[3,128,32], index: 12, kind: input, shape index: {}]
  %s13 = inlined_call_operand.vmem [shape: f32[1,32], index: 13, kind: input, shape index: {}]
  %s14 = inlined_call_operand.vmem [shape: f32[2,16,64], index: 14, kind: output, shape index: {}]
  %s15 = sld [smem:[#allocation0]]
  $region89: #{cnn_autoencoder_forward.1} parent=0
    _
  %s17 = ssub.s32 1, %s15
  %s18 = scalar_select 0, %s17, %s15
  loop: start=0, step=1, limit=4
  $region2: #{cnn_autoencoder_forward.1} parent=0 // loop_pre_header
    _
  $region3: #{cnn_autoencoder_forward.1} parent=0 // loop_header
    %s20 = sphi 0, %s24
    %p21 = scmp.ge.s32.totalorder %s20, 4
    %s30 = sphi 0, %s32
    %s33 = sphi 0, %s30
    %s34 = sphi 0, %s33
    %s50 = sphi 0, %s34
    %s56 = sphi 0, %s58
    %s59 = sphi 0, %s56
    %s60 = sphi 0, %s59
    %s76 = sphi 0, %s60
    %s80 = sphi 0, %s80
    %s82 = sphi 0, %s80
    %s83 = sphi 0, %s82
    %s97 = sphi 0, %s83
    %s101 = sphi 0, %s101
    %s103 = sphi 0, %s101
    %s104 = sphi 0, %s103
    %s118 = sphi 0, %s104
    %s122 = sphi 0, %s122
    %s124 = sphi 0, %s122
    %s125 = sphi 0, %s124
    %s139 = sphi 0, %s125
    %s143 = sphi 0, %s143
    %s145 = sphi 0, %s143
    %s146 = sphi 0, %s145
    %s160 = sphi 0, %s146
    %s164 = sphi 0, %s164
    %s166 = sphi 0, %s164
    %s167 = sphi 0, %s166
    %s181 = sphi 0, %s167
    %s185 = sphi 0, %s185
    %s187 = sphi 0, %s185
    %s188 = sphi 0, %s187
    %s202 = sphi 0, %s188
    %s206 = sphi 0, %s206
    %s208 = sphi 0, %s206
    %s209 = sphi 0, %s208
    %s223 = sphi 0, %s209
    %s227 = sphi 0, %s227
    %s229 = sphi 0, %s227
    %s230 = sphi 0, %s229
    %s244 = sphi 0, %s230
    %s248 = sphi 0, %s248
    %s250 = sphi 0, %s248
    %s251 = sphi 0, %s250
    %s265 = sphi 0, %s251
    %s269 = sphi 0, %s269
    %s271 = sphi 0, %s269
    %s272 = sphi 0, %s271
    %s286 = sphi 0, %s272
    %s290 = sphi 0, %s290
    %s292 = sphi 0, %s290
    %s293 = sphi 0, %s292
    %s307 = sphi 0, %s293
    %s311 = sphi 0, %s311
    %s313 = sphi 0, %s311
    %s314 = sphi 0, %s313
    %s328 = sphi 0, %s314
    %s334 = sphi 0, %s336
    %s337 = sphi 0, %s334
    %s338 = sphi 0, %s337
    %s354 = sphi 0, %s338
  $region4: #{cnn_autoencoder_forward.1} parent=0 // loop_header_branch
    %23 = sbr.rel (%p21) target = $region8
  $region5: #{cnn_autoencoder_forward.1} parent=0 // loop_body
    %s25 = ssub.s32 %s20, 1
    %s26 = ssub.s32 %s20, 2
    %s27 = sadd.s32 %s20, 1
    %s28 = ssub.s32 %s20, %s27
    %p29 = scmp.eq.s32.totalorder %s28, 0
    %s31 = sadd.s32 %s30, 1
    %s32 = scalar_select %p29, %s30, %s31
    %p35 = pneg %p29
    %p36 = scmp.eq.s32.totalorder %s20, 1
    %p37 = por %p35, %p36
    %p38 = scmp.ne.s32.totalorder %s30, %s33
    %p39 = scmp.eq.s32.totalorder %s20, 0
    %p40 = por %p38, %p39
    %p41 = scmp.ne.s32.totalorder %s30, %s33
    %p42 = scmp.eq.s32.totalorder %s25, 1
    %p43 = por %p41, %p42
    %p44 = scmp.ne.s32.totalorder %s33, %s34
    %p45 = scmp.eq.s32.totalorder %s25, 0
    %p46 = por %p44, %p45
    %p47 = scmp.ne.s32.totalorder %s33, %s34
    %p48 = scmp.eq.s32.totalorder %s26, 1
    %p49 = por %p47, %p48
    %p51 = scmp.ne.s32.totalorder %s34, %s50
    %p52 = scmp.eq.s32.totalorder %s26, 0
    %p53 = por %p51, %p52
    %s54 = ssub.s32 %s20, %s27
    %p55 = scmp.eq.s32.totalorder %s54, 0
    %s57 = sadd.s32 %s56, 1
    %s58 = scalar_select %p55, %s56, %s57
    %p61 = pneg %p55
    %p62 = scmp.eq.s32.totalorder %s20, 1
    %p63 = por %p61, %p62
    %p64 = scmp.ne.s32.totalorder %s56, %s59
    %p65 = scmp.eq.s32.totalorder %s20, 0
    %p66 = por %p64, %p65
    %p67 = scmp.ne.s32.totalorder %s56, %s59
    %p68 = scmp.eq.s32.totalorder %s25, 1
    %p69 = por %p67, %p68
    %p70 = scmp.ne.s32.totalorder %s59, %s60
    %p71 = scmp.eq.s32.totalorder %s25, 0
    %p72 = por %p70, %p71
    %p73 = scmp.ne.s32.totalorder %s59, %s60
    %p74 = scmp.eq.s32.totalorder %s26, 1
    %p75 = por %p73, %p74
    %p77 = scmp.ne.s32.totalorder %s60, %s76
    %p78 = scmp.eq.s32.totalorder %s26, 0
    %p79 = por %p77, %p78
    %s81 = sadd.s32 %s80, 1
    %p84 = scmp.eq.s32.totalorder %s20, 1
    %p85 = scmp.ne.s32.totalorder %s80, %s82
    %p86 = scmp.eq.s32.totalorder %s20, 0
    %p87 = por %p85, %p86
    %p88 = scmp.ne.s32.totalorder %s80, %s82
    %p89 = scmp.eq.s32.totalorder %s25, 1
    %p90 = por %p88, %p89
    %p91 = scmp.ne.s32.totalorder %s82, %s83
    %p92 = scmp.eq.s32.totalorder %s25, 0
    %p93 = por %p91, %p92
    %p94 = scmp.ne.s32.totalorder %s82, %s83
    %p95 = scmp.eq.s32.totalorder %s26, 1
    %p96 = por %p94, %p95
    %p98 = scmp.ne.s32.totalorder %s83, %s97
    %p99 = scmp.eq.s32.totalorder %s26, 0
    %p100 = por %p98, %p99
    %s102 = sadd.s32 %s101, 1
    %p105 = scmp.eq.s32.totalorder %s20, 1
    %p106 = scmp.ne.s32.totalorder %s101, %s103
    %p107 = scmp.eq.s32.totalorder %s20, 0
    %p108 = por %p106, %p107
    %p109 = scmp.ne.s32.totalorder %s101, %s103
    %p110 = scmp.eq.s32.totalorder %s25, 1
    %p111 = por %p109, %p110
    %p112 = scmp.ne.s32.totalorder %s103, %s104
    %p113 = scmp.eq.s32.totalorder %s25, 0
    %p114 = por %p112, %p113
    %p115 = scmp.ne.s32.totalorder %s103, %s104
    %p116 = scmp.eq.s32.totalorder %s26, 1
    %p117 = por %p115, %p116
    %p119 = scmp.ne.s32.totalorder %s104, %s118
    %p120 = scmp.eq.s32.totalorder %s26, 0
    %p121 = por %p119, %p120
    %s123 = sadd.s32 %s122, 1
    %p126 = scmp.eq.s32.totalorder %s20, 1
    %p127 = scmp.ne.s32.totalorder %s122, %s124
    %p128 = scmp.eq.s32.totalorder %s20, 0
    %p129 = por %p127, %p128
    %p130 = scmp.ne.s32.totalorder %s122, %s124
    %p131 = scmp.eq.s32.totalorder %s25, 1
    %p132 = por %p130, %p131
    %p133 = scmp.ne.s32.totalorder %s124, %s125
    %p134 = scmp.eq.s32.totalorder %s25, 0
    %p135 = por %p133, %p134
    %p136 = scmp.ne.s32.totalorder %s124, %s125
    %p137 = scmp.eq.s32.totalorder %s26, 1
    %p138 = por %p136, %p137
    %p140 = scmp.ne.s32.totalorder %s125, %s139
    %p141 = scmp.eq.s32.totalorder %s26, 0
    %p142 = por %p140, %p141
    %s144 = sadd.s32 %s143, 1
    %p147 = scmp.eq.s32.totalorder %s20, 1
    %p148 = scmp.ne.s32.totalorder %s143, %s145
    %p149 = scmp.eq.s32.totalorder %s20, 0
    %p150 = por %p148, %p149
    %p151 = scmp.ne.s32.totalorder %s143, %s145
    %p152 = scmp.eq.s32.totalorder %s25, 1
    %p153 = por %p151, %p152
    %p154 = scmp.ne.s32.totalorder %s145, %s146
    %p155 = scmp.eq.s32.totalorder %s25, 0
    %p156 = por %p154, %p155
    %p157 = scmp.ne.s32.totalorder %s145, %s146
    %p158 = scmp.eq.s32.totalorder %s26, 1
    %p159 = por %p157, %p158
    %p161 = scmp.ne.s32.totalorder %s146, %s160
    %p162 = scmp.eq.s32.totalorder %s26, 0
    %p163 = por %p161, %p162
    %s165 = sadd.s32 %s164, 1
    %p168 = scmp.eq.s32.totalorder %s20, 1
    %p169 = scmp.ne.s32.totalorder %s164, %s166
    %p170 = scmp.eq.s32.totalorder %s20, 0
    %p171 = por %p169, %p170
    %p172 = scmp.ne.s32.totalorder %s164, %s166
    %p173 = scmp.eq.s32.totalorder %s25, 1
    %p174 = por %p172, %p173
    %p175 = scmp.ne.s32.totalorder %s166, %s167
    %p176 = scmp.eq.s32.totalorder %s25, 0
    %p177 = por %p175, %p176
    %p178 = scmp.ne.s32.totalorder %s166, %s167
    %p179 = scmp.eq.s32.totalorder %s26, 1
    %p180 = por %p178, %p179
    %p182 = scmp.ne.s32.totalorder %s167, %s181
    %p183 = scmp.eq.s32.totalorder %s26, 0
    %p184 = por %p182, %p183
    %s186 = sadd.s32 %s185, 1
    %p189 = scmp.eq.s32.totalorder %s20, 1
    %p190 = scmp.ne.s32.totalorder %s185, %s187
    %p191 = scmp.eq.s32.totalorder %s20, 0
    %p192 = por %p190, %p191
    %p193 = scmp.ne.s32.totalorder %s185, %s187
    %p194 = scmp.eq.s32.totalorder %s25, 1
    %p195 = por %p193, %p194
    %p196 = scmp.ne.s32.totalorder %s187, %s188
    %p197 = scmp.eq.s32.totalorder %s25, 0
    %p198 = por %p196, %p197
    %p199 = scmp.ne.s32.totalorder %s187, %s188
    %p200 = scmp.eq.s32.totalorder %s26, 1
    %p201 = por %p199, %p200
    %p203 = scmp.ne.s32.totalorder %s188, %s202
    %p204 = scmp.eq.s32.totalorder %s26, 0
    %p205 = por %p203, %p204
    %s207 = sadd.s32 %s206, 1
    %p210 = scmp.eq.s32.totalorder %s20, 1
    %p211 = scmp.ne.s32.totalorder %s206, %s208
    %p212 = scmp.eq.s32.totalorder %s20, 0
    %p213 = por %p211, %p212
    %p214 = scmp.ne.s32.totalorder %s206, %s208
    %p215 = scmp.eq.s32.totalorder %s25, 1
    %p216 = por %p214, %p215
    %p217 = scmp.ne.s32.totalorder %s208, %s209
    %p218 = scmp.eq.s32.totalorder %s25, 0
    %p219 = por %p217, %p218
    %p220 = scmp.ne.s32.totalorder %s208, %s209
    %p221 = scmp.eq.s32.totalorder %s26, 1
    %p222 = por %p220, %p221
    %p224 = scmp.ne.s32.totalorder %s209, %s223
    %p225 = scmp.eq.s32.totalorder %s26, 0
    %p226 = por %p224, %p225
    %s228 = sadd.s32 %s227, 1
    %p231 = scmp.eq.s32.totalorder %s20, 1
    %p232 = scmp.ne.s32.totalorder %s227, %s229
    %p233 = scmp.eq.s32.totalorder %s20, 0
    %p234 = por %p232, %p233
    %p235 = scmp.ne.s32.totalorder %s227, %s229
    %p236 = scmp.eq.s32.totalorder %s25, 1
    %p237 = por %p235, %p236
    %p238 = scmp.ne.s32.totalorder %s229, %s230
    %p239 = scmp.eq.s32.totalorder %s25, 0
    %p240 = por %p238, %p239
    %p241 = scmp.ne.s32.totalorder %s229, %s230
    %p242 = scmp.eq.s32.totalorder %s26, 1
    %p243 = por %p241, %p242
    %p245 = scmp.ne.s32.totalorder %s230, %s244
    %p246 = scmp.eq.s32.totalorder %s26, 0
    %p247 = por %p245, %p246
    %s249 = sadd.s32 %s248, 1
    %p252 = scmp.eq.s32.totalorder %s20, 1
    %p253 = scmp.ne.s32.totalorder %s248, %s250
    %p254 = scmp.eq.s32.totalorder %s20, 0
    %p255 = por %p253, %p254
    %p256 = scmp.ne.s32.totalorder %s248, %s250
    %p257 = scmp.eq.s32.totalorder %s25, 1
    %p258 = por %p256, %p257
    %p259 = scmp.ne.s32.totalorder %s250, %s251
    %p260 = scmp.eq.s32.totalorder %s25, 0
    %p261 = por %p259, %p260
    %p262 = scmp.ne.s32.totalorder %s250, %s251
    %p263 = scmp.eq.s32.totalorder %s26, 1
    %p264 = por %p262, %p263
    %p266 = scmp.ne.s32.totalorder %s251, %s265
    %p267 = scmp.eq.s32.totalorder %s26, 0
    %p268 = por %p266, %p267
    %s270 = sadd.s32 %s269, 1
    %p273 = scmp.eq.s32.totalorder %s20, 1
    %p274 = scmp.ne.s32.totalorder %s269, %s271
    %p275 = scmp.eq.s32.totalorder %s20, 0
    %p276 = por %p274, %p275
    %p277 = scmp.ne.s32.totalorder %s269, %s271
    %p278 = scmp.eq.s32.totalorder %s25, 1
    %p279 = por %p277, %p278
    %p280 = scmp.ne.s32.totalorder %s271, %s272
    %p281 = scmp.eq.s32.totalorder %s25, 0
    %p282 = por %p280, %p281
    %p283 = scmp.ne.s32.totalorder %s271, %s272
    %p284 = scmp.eq.s32.totalorder %s26, 1
    %p285 = por %p283, %p284
    %p287 = scmp.ne.s32.totalorder %s272, %s286
    %p288 = scmp.eq.s32.totalorder %s26, 0
    %p289 = por %p287, %p288
    %s291 = sadd.s32 %s290, 1
    %p294 = scmp.eq.s32.totalorder %s20, 1
    %p295 = scmp.ne.s32.totalorder %s290, %s292
    %p296 = scmp.eq.s32.totalorder %s20, 0
    %p297 = por %p295, %p296
    %p298 = scmp.ne.s32.totalorder %s290, %s292
    %p299 = scmp.eq.s32.totalorder %s25, 1
    %p300 = por %p298, %p299
    %p301 = scmp.ne.s32.totalorder %s292, %s293
    %p302 = scmp.eq.s32.totalorder %s25, 0
    %p303 = por %p301, %p302
    %p304 = scmp.ne.s32.totalorder %s292, %s293
    %p305 = scmp.eq.s32.totalorder %s26, 1
    %p306 = por %p304, %p305
    %p308 = scmp.ne.s32.totalorder %s293, %s307
    %p309 = scmp.eq.s32.totalorder %s26, 0
    %p310 = por %p308, %p309
    %s312 = sadd.s32 %s311, 1
    %p315 = scmp.eq.s32.totalorder %s20, 1
    %p316 = scmp.ne.s32.totalorder %s311, %s313
    %p317 = scmp.eq.s32.totalorder %s20, 0
    %p318 = por %p316, %p317
    %p319 = scmp.ne.s32.totalorder %s311, %s313
    %p320 = scmp.eq.s32.totalorder %s25, 1
    %p321 = por %p319, %p320
    %p322 = scmp.ne.s32.totalorder %s313, %s314
    %p323 = scmp.eq.s32.totalorder %s25, 0
    %p324 = por %p322, %p323
    %p325 = scmp.ne.s32.totalorder %s313, %s314
    %p326 = scmp.eq.s32.totalorder %s26, 1
    %p327 = por %p325, %p326
    %p329 = scmp.ne.s32.totalorder %s314, %s328
    %p330 = scmp.eq.s32.totalorder %s26, 0
    %p331 = por %p329, %p330
    %s332 = ssub.s32 %s20, %s27
    %p333 = scmp.eq.s32.totalorder %s332, 0
    %s335 = sadd.s32 %s334, 1
    %s336 = scalar_select %p333, %s334, %s335
    %p339 = pneg %p333
    %p340 = scmp.eq.s32.totalorder %s20, 1
    %p341 = por %p339, %p340
    %p342 = scmp.ne.s32.totalorder %s334, %s337
    %p343 = scmp.eq.s32.totalorder %s20, 0
    %p344 = por %p342, %p343
    %p345 = scmp.ne.s32.totalorder %s334, %s337
    %p346 = scmp.eq.s32.totalorder %s25, 1
    %p347 = por %p345, %p346
    %p348 = scmp.ne.s32.totalorder %s337, %s338
    %p349 = scmp.eq.s32.totalorder %s25, 0
    %p350 = por %p348, %p349
    %p351 = scmp.ne.s32.totalorder %s337, %s338
    %p352 = scmp.eq.s32.totalorder %s26, 1
    %p353 = por %p351, %p352
    %p355 = scmp.ne.s32.totalorder %s338, %s354
    %p356 = scmp.eq.s32.totalorder %s26, 0
    %p357 = por %p355, %p356
    %p358 = scmp.le.s32.totalorder 1, %s20
    %p359 = scmp.lt.s32.totalorder %s20, 3
    %p360 = pnand %p358, %p359
    %p361 = pneg %p360
    // Predicated region
    $region9: #{cnn_autoencoder_forward.1} parent=5 // pred_check
      _
    $region10: #{cnn_autoencoder_forward.1} parent=5 // pred_check_branch
      %363 = sbr.rel (%p360) target = $region12
    $region11: #{cnn_autoencoder_forward.1} parent=5 // pred_region
      %s364 = ssub.s32 %s20, 1
      // Predicated region
      $region13: #{cnn_autoencoder_forward.1} parent=11 // pred_check
        %p365 = pneg %p93
      $region14: #{cnn_autoencoder_forward.1} parent=11 // pred_check_branch
        %367 = sbr.rel (%p365) target = $region16
      $region15: #{cnn_autoencoder_forward.1} parent=11 // pred_region
        _
      $region16: #{cnn_autoencoder_forward.1} parent=11 // pred_fallthru
        _
      // Predicated region
      $region17: #{cnn_autoencoder_forward.1} parent=11 // pred_check
        %p368 = pneg %p114
      $region18: #{cnn_autoencoder_forward.1} parent=11 // pred_check_branch
        %370 = sbr.rel (%p368) target = $region20
      $region19: #{cnn_autoencoder_forward.1} parent=11 // pred_region
        _
      $region20: #{cnn_autoencoder_forward.1} parent=11 // pred_fallthru
        _
      // Predicated region
      $region21: #{cnn_autoencoder_forward.1} parent=11 // pred_check
        %p371 = pneg %p135
      $region22: #{cnn_autoencoder_forward.1} parent=11 // pred_check_branch
        %373 = sbr.rel (%p371) target = $region24
      $region23: #{cnn_autoencoder_forward.1} parent=11 // pred_region
        _
      $region24: #{cnn_autoencoder_forward.1} parent=11 // pred_fallthru
        _
      // Predicated region
      $region25: #{cnn_autoencoder_forward.1} parent=11 // pred_check
        %p374 = pneg %p156
      $region26: #{cnn_autoencoder_forward.1} parent=11 // pred_check_branch
        %376 = sbr.rel (%p374) target = $region28
      $region27: #{cnn_autoencoder_forward.1} parent=11 // pred_region
        _
      $region28: #{cnn_autoencoder_forward.1} parent=11 // pred_fallthru
        _
      // Predicated region
      $region29: #{cnn_autoencoder_forward.1} parent=11 // pred_check
        %p377 = pneg %p177
      $region30: #{cnn_autoencoder_forward.1} parent=11 // pred_check_branch
        %379 = sbr.rel (%p377) target = $region32
      $region31: #{cnn_autoencoder_forward.1} parent=11 // pred_region
        _
      $region32: #{cnn_autoencoder_forward.1} parent=11 // pred_fallthru
        _
      // Predicated region
      $region33: #{cnn_autoencoder_forward.1} parent=11 // pred_check
        %p380 = pneg %p198
      $region34: #{cnn_autoencoder_forward.1} parent=11 // pred_check_branch
        %382 = sbr.rel (%p380) target = $region36
      $region35: #{cnn_autoencoder_forward.1} parent=11 // pred_region
        _
      $region36: #{cnn_autoencoder_forward.1} parent=11 // pred_fallthru
        _
      // Predicated region
      $region37: #{cnn_autoencoder_forward.1} parent=11 // pred_check
        %p383 = pneg %p219
      $region38: #{cnn_autoencoder_forward.1} parent=11 // pred_check_branch
        %385 = sbr.rel (%p383) target = $region40
      $region39: #{cnn_autoencoder_forward.1} parent=11 // pred_region
        _
      $region40: #{cnn_autoencoder_forward.1} parent=11 // pred_fallthru
        _
      // Predicated region
      $region41: #{cnn_autoencoder_forward.1} parent=11 // pred_check
        %p386 = pneg %p240
      $region42: #{cnn_autoencoder_forward.1} parent=11 // pred_check_branch
        %388 = sbr.rel (%p386) target = $region44
      $region43: #{cnn_autoencoder_forward.1} parent=11 // pred_region
        _
      $region44: #{cnn_autoencoder_forward.1} parent=11 // pred_fallthru
        _
      // Predicated region
      $region45: #{cnn_autoencoder_forward.1} parent=11 // pred_check
        %p389 = pneg %p261
      $region46: #{cnn_autoencoder_forward.1} parent=11 // pred_check_branch
        %391 = sbr.rel (%p389) target = $region48
      $region47: #{cnn_autoencoder_forward.1} parent=11 // pred_region
        _
      $region48: #{cnn_autoencoder_forward.1} parent=11 // pred_fallthru
        _
      // Predicated region
      $region49: #{cnn_autoencoder_forward.1} parent=11 // pred_check
        %p392 = pneg %p282
      $region50: #{cnn_autoencoder_forward.1} parent=11 // pred_check_branch
        %394 = sbr.rel (%p392) target = $region52
      $region51: #{cnn_autoencoder_forward.1} parent=11 // pred_region
        _
      $region52: #{cnn_autoencoder_forward.1} parent=11 // pred_fallthru
        _
      // Predicated region
      $region53: #{cnn_autoencoder_forward.1} parent=11 // pred_check
        %p395 = pneg %p303
      $region54: #{cnn_autoencoder_forward.1} parent=11 // pred_check_branch
        %397 = sbr.rel (%p395) target = $region56
      $region55: #{cnn_autoencoder_forward.1} parent=11 // pred_region
        _
      $region56: #{cnn_autoencoder_forward.1} parent=11 // pred_fallthru
        _
      // Predicated region
      $region57: #{cnn_autoencoder_forward.1} parent=11 // pred_check
        %p398 = pneg %p324
      $region58: #{cnn_autoencoder_forward.1} parent=11 // pred_check_branch
        %400 = sbr.rel (%p398) target = $region60
      $region59: #{cnn_autoencoder_forward.1} parent=11 // pred_region
        _
      $region60: #{cnn_autoencoder_forward.1} parent=11 // pred_fallthru
        _
    $region12: #{cnn_autoencoder_forward.1} parent=5 // pred_fallthru
      _
    %p401 = scmp.lt.s32.totalorder %s20, 2
    // Predicated region
    $region61: #{cnn_autoencoder_forward.1} parent=5 // pred_check
      %p402 = pneg %p401
    $region62: #{cnn_autoencoder_forward.1} parent=5 // pred_check_branch
      %404 = sbr.rel (%p402) target = $region64
    $region63: #{cnn_autoencoder_forward.1} parent=5 // pred_region
      // Predicated region
      $region65: #{cnn_autoencoder_forward.1} parent=63 // pred_check
        %p405 = pneg %p40
      $region66: #{cnn_autoencoder_forward.1} parent=63 // pred_check_branch
        %407 = sbr.rel (%p405) target = $region68
      $region67: #{cnn_autoencoder_forward.1} parent=63 // pred_region
        %p408 = scmp.lt.s32.totalorder %s20, 1
        %s409 = scalar_select %p408, %s20, 1
        %s410 = smul.addr %s409, 2
        %s411 = scalar_lea.vmem %s0, %s410
      $region68: #{cnn_autoencoder_forward.1} parent=63 // pred_fallthru
        _
      // Predicated region
      $region69: #{cnn_autoencoder_forward.1} parent=63 // pred_check
        %p412 = pneg %p66
      $region70: #{cnn_autoencoder_forward.1} parent=63 // pred_check_branch
        %414 = sbr.rel (%p412) target = $region72
      $region71: #{cnn_autoencoder_forward.1} parent=63 // pred_region
        %p415 = scmp.lt.s32.totalorder %s20, 1
        %s416 = scalar_select %p415, %s20, 1
        %s417 = smul.addr %s416, 2
        %s418 = smul.addr %s417, 8
        %s419 = scalar_lea.vmem %s1, %s418
      $region72: #{cnn_autoencoder_forward.1} parent=63 // pred_fallthru
        _
    $region64: #{cnn_autoencoder_forward.1} parent=5 // pred_fallthru
      _
    %p420 = scmp.le.s32.totalorder 1, %s20
    %p421 = scmp.lt.s32.totalorder %s20, 3
    %p422 = pnand %p420, %p421
    %p423 = pneg %p422
    // Predicated region
    $region73: #{cnn_autoencoder_forward.1} parent=5 // pred_check
      _
    $region74: #{cnn_autoencoder_forward.1} parent=5 // pred_check_branch
      %425 = sbr.rel (%p422) target = $region76
    $region75: #{cnn_autoencoder_forward.1} parent=5 // pred_region
      %s426 = ssub.s32 %s20, 1
      %p427 = scmp.lt.s32.totalorder %s25, 1
      %s428 = scalar_select %p427, %s25, 1
      %s429 = smul.addr %s428, 2
      %s430 = scalar_lea.vmem %s0, %s429
      %p431 = pneg %p46
      %p432 = pneg %p43
      %p433 = scmp.lt.s32.totalorder %s25, 1
      %s434 = scalar_select %p433, %s25, 1
      %s435 = smul.addr %s434, 2
      %s436 = smul.addr %s435, 8
      %s437 = scalar_lea.vmem %s1, %s436
      %p438 = pneg %p72
      %p439 = pneg %p69
      %p440 = pneg %p93
      %p441 = pneg %p90
      %p442 = pneg %p114
      %p443 = pneg %p111
      %p444 = pneg %p135
      %p445 = pneg %p132
      %p446 = pneg %p156
      %p447 = pneg %p153
      %p448 = pneg %p177
      %p449 = pneg %p174
      %p450 = pneg %p198
      %p451 = pneg %p195
      %p452 = pneg %p219
      %p453 = pneg %p216
      %p454 = pneg %p240
      %p455 = pneg %p237
      %p456 = pneg %p261
      %p457 = pneg %p258
      %p458 = pneg %p282
      %p459 = pneg %p279
      %p460 = pneg %p303
      %p461 = pneg %p300
      %p462 = pneg %p324
      %p463 = pneg %p321
      %p464 = pneg %p350
      %p465 = pneg %p347
      %p466 = scmp.lt.s32.totalorder %s25, 1
      %s467 = scalar_select %p466, %s25, 1
      %s468 = smul.addr %s467, 2
      %s469 = smul.addr %s468, 8
      %s470 = scalar_lea.vmem %s14, %s469
      %p471 = scmp.lt.s32.totalorder %s25, 1
      %s472 = scalar_select %p471, %s25, 1
      %s473 = smul.addr %s472, 2
      %s474 = scalar_lea.vmem %s0, %s473
      %p475 = scmp.lt.s32.totalorder %s25, 1
      %s476 = scalar_select %p475, %s25, 1
      %s477 = smul.addr %s476, 2
      %s478 = smul.addr %s477, 8
      %s479 = scalar_lea.vmem %s1, %s478
      %p480 = scmp.lt.s32.totalorder %s25, 1
      %s481 = scalar_select %p480, %s25, 1
      %s482 = smul.addr %s481, 2
      %s483 = smul.addr %s482, 8
      %s484 = scalar_lea.vmem %s14, %s483
      %v485 = vld [vmem:[%s474] sm:$0x3]
      %v486 = vld [vmem:[%s2] sm:$0xff]
      %v487 = vld [vmem:[%s2 + $0x8] sm:$0xff]
      %v488 = vld [vmem:[%s2 + $0x10] sm:$0xff]
      %v489 = vld [vmem:[%s2 + $0x18] sm:$0xff]
      %v490 = vld [vmem:[%s2 + $0x20] sm:$0xff]
      %v491 = vld [vmem:[%s2 + $0x28] sm:$0xff]
      %v492 = vld [vmem:[%s2 + $0x30] sm:$0xff]
      %v493 = vld [vmem:[%s2 + $0x38] sm:$0xff]
      %v494 = vld [vmem:[%s2 + $0x40] sm:$0xff]
      %v495 = vld [vmem:[%s2 + $0x48] sm:$0xff]
      %v496 = vld [vmem:[%s2 + $0x50] sm:$0xff]
      %v497 = vld [vmem:[%s2 + $0x58] sm:$0xff]
      %v498 = vld [vmem:[%s2 + $0x60] sm:$0xff]
      %v499 = vld [vmem:[%s2 + $0x68] sm:$0xff]
      %v500 = vld [vmem:[%s2 + $0x70] sm:$0xff]
      %v501 = vld [vmem:[%s2 + $0x78] sm:$0xff]
      %v502 = vld [vmem:[%s2 + $0x80] sm:$0xff]
      %v503 = vld [vmem:[%s2 + $0x88] sm:$0xff]
      %v504 = vld [vmem:[%s2 + $0x90] sm:$0xff]
      %v505 = vld [vmem:[%s2 + $0x98] sm:$0xff]
      %v506 = vld [vmem:[%s2 + $0xa0] sm:$0xff]
      %v507 = vld [vmem:[%s2 + $0xa8] sm:$0xff]
      %v508 = vld [vmem:[%s2 + $0xb0] sm:$0xff]
      %v509 = vld [vmem:[%s2 + $0xb8] sm:$0xff]
      %v510 = vld [vmem:[%s2 + $0xc0] sm:$0xff]
      %v511 = vld [vmem:[%s2 + $0xc8] sm:$0xff]
      %v512 = vld [vmem:[%s2 + $0xd0] sm:$0xff]
      %v513 = vld [vmem:[%s2 + $0xd8] sm:$0xff]
      %v514 = vld [vmem:[%s2 + $0xe0] sm:$0xff]
      %v515 = vld [vmem:[%s2 + $0xe8] sm:$0xff]
      %v516 = vld [vmem:[%s2 + $0xf0] sm:$0xff]
      %v517 = vld [vmem:[%s2 + $0xf8] sm:$0xff]
      %v518 = vld [vmem:[%s3] sm:$0x1]
      %v520 = vlaneseq
      %v521 = vshrl.u32 %v520, 7
      %v522 = vsub.s32 0, %v521
      %v523 = vrot.slane %v485, %v522
      %v524 = vlaneseq
      %v525 = vshrl.u32 %v524, 7
      %v526 = vsub.s32 1, %v525
      %v527 = vrot.slane %v485, %v526
      %530 = vmatprep.subr.mxu0 0.0
      %531 = vmatpush1.msra.mxu0 %v486
      %532 = vmatprep.subr.mxu0 0.0
      %533 = vmatpush1.msra.mxu0 %v487
      %534 = vmatprep.subr.mxu0 0.0
      %535 = vmatpush1.msra.mxu0 %v488
      %536 = vmatprep.subr.mxu0 0.0
      %537 = vmatpush1.msra.mxu0 %v489
      %538 = vmatprep.subr.mxu0 0.0
      %539 = vmatpush1.msra.mxu0 %v490
      %540 = vmatprep.subr.mxu0 0.0
      %541 = vmatpush1.msra.mxu0 %v491
      %542 = vmatprep.subr.mxu0 0.0
      %543 = vmatpush1.msra.mxu0 %v492
      %544 = vmatprep.subr.mxu0 0.0
      %545 = vmatpush1.msra.mxu0 %v493
      %546 = vmatprep.subr.mxu0 0.0
      %547 = vmatpush1.msra.mxu0 %v494
      %548 = vmatprep.subr.mxu0 0.0
      %549 = vmatpush1.msra.mxu0 %v495
      %550 = vmatprep.subr.mxu0 0.0
      %551 = vmatpush1.msra.mxu0 %v496
      %552 = vmatprep.subr.mxu0 0.0
      %553 = vmatpush1.msra.mxu0 %v497
      %554 = vmatprep.subr.mxu0 0.0
      %555 = vmatpush1.msra.mxu0 %v498
      %556 = vmatprep.subr.mxu0 0.0
      %557 = vmatpush1.msra.mxu0 %v499
      %558 = vmatprep.subr.mxu0 0.0
      %559 = vmatpush1.msra.mxu0 %v500
      %560 = vmatprep.subr.mxu0 0.0
      %561 = vmatpush1.msra.mxu0 %v501
      %562 = vmatprep.subr.mxu0 0.0
      %563 = vmatpush1.msra.mxu0 %v502
      %564 = vmatprep.subr.mxu0 0.0
      %565 = vmatpush1.msra.mxu0 %v503
      %566 = vmatprep.subr.mxu0 0.0
      %567 = vmatpush1.msra.mxu0 %v504
      %568 = vmatprep.subr.mxu0 0.0
      %569 = vmatpush1.msra.mxu0 %v505
      %570 = vmatprep.subr.mxu0 0.0
      %571 = vmatpush1.msra.mxu0 %v506
      %572 = vmatprep.subr.mxu0 0.0
      %573 = vmatpush1.msra.mxu0 %v507
      %574 = vmatprep.subr.mxu0 0.0
      %575 = vmatpush1.msra.mxu0 %v508
      %576 = vmatprep.subr.mxu0 0.0
      %577 = vmatpush1.msra.mxu0 %v509
      %578 = vmatprep.subr.mxu0 0.0
      %579 = vmatpush1.msra.mxu0 %v510
      %580 = vmatprep.subr.mxu0 0.0
      %581 = vmatpush1.msra.mxu0 %v511
      %582 = vmatprep.subr.mxu0 0.0
      %583 = vmatpush1.msra.mxu0 %v512
      %584 = vmatprep.subr.mxu0 0.0
      %585 = vmatpush1.msra.mxu0 %v513
      %586 = vmatprep.subr.mxu0 0.0
      %587 = vmatpush1.msra.mxu0 %v514
      %588 = vmatprep.subr.mxu0 0.0
      %589 = vmatpush1.msra.mxu0 %v515
      %590 = vmatprep.subr.mxu0 0.0
      %591 = vmatpush1.msra.mxu0 %v516
      %592 = vmatprep.subr.mxu0 0.0
      %593 = vmatpush1.msra.mxu0 %v517
      %594 = vmatprep.mubr.f32.mxu0 %v527
      %595 = vmatmul.mubr.f32.gmra.mrb[0].mxu0 %v523
      %v596 = vpop.f32.mrb[0].mxu0
      %v597 = vadd.f32 %v518, %v596
      %v598 = vpop.f32.mrb[0].mxu0
      %599 = vdwg.mxu0
      %v600 = vmax.f32 %v597, 0.0
      %v601 = vld [vmem:[%s4] sm:$0xff]
      %v602 = vld [vmem:[%s4 + $0x8] sm:$0xff]
      %v603 = vld [vmem:[%s4 + $0x10] sm:$0xff]
      %v604 = vld [vmem:[%s4 + $0x18] sm:$0xff]
      %v605 = vld [vmem:[%s5] sm:$0x1]
      %vm606 = vcmask 261120
      %v608 = vsel %vm606, %v600, 0
      %610 = vmatprep.subr.mxu0 0.0
      %611 = vmatpush1.msra.mxu0 %v601
      %612 = vmatprep.subr.mxu0 0.0
      %613 = vmatpush1.msra.mxu0 %v602
      %614 = vmatprep.subr.mxu0 0.0
      %615 = vmatpush1.msra.mxu0 %v603
      %616 = vmatprep.subr.mxu0 0.0
      %617 = vmatpush1.msra.mxu0 %v604
      %618 = vmatprep.subr.mxu0 0.0
      %619 = vmatpush1.msra.mxu0 0.0
      %620 = vmatprep.subr.mxu0 0.0
      %621 = vmatpush1.msra.mxu0 0.0
      %622 = vmatprep.subr.mxu0 0.0
      %623 = vmatpush1.msra.mxu0 0.0
      %624 = vmatprep.subr.mxu0 0.0
      %625 = vmatpush1.msra.mxu0 0.0
      %626 = vmatprep.subr.mxu0 0.0
      %627 = vmatpush1.msra.mxu0 0.0
      %628 = vmatprep.subr.mxu0 0.0
      %629 = vmatpush1.msra.mxu0 0.0
      %630 = vmatprep.subr.mxu0 0.0
      %631 = vmatpush1.msra.mxu0 0.0
      %632 = vmatprep.subr.mxu0 0.0
      %633 = vmatpush1.msra.mxu0 0.0
      %634 = vmatprep.subr.mxu0 0.0
      %635 = vmatpush1.msra.mxu0 0.0
      %636 = vmatprep.subr.mxu0 0.0
      %637 = vmatpush1.msra.mxu0 0.0
      %638 = vmatprep.subr.mxu0 0.0
      %639 = vmatpush1.msra.mxu0 0.0
      %640 = vmatprep.subr.mxu0 0.0
      %641 = vmatpush1.msra.mxu0 0.0
      %642 = vmatprep.subr.mxu0 0.0
      %643 = vmatpush1.msra.mxu0 0.0
      %644 = vmatprep.subr.mxu0 0.0
      %645 = vmatpush1.msra.mxu0 0.0
      %646 = vmatprep.subr.mxu0 0.0
      %647 = vmatpush1.msra.mxu0 0.0
      %648 = vmatprep.subr.mxu0 0.0
      %649 = vmatpush1.msra.mxu0 0.0
      %650 = vmatprep.subr.mxu0 0.0
      %651 = vmatpush1.msra.mxu0 0.0
      %652 = vmatprep.subr.mxu0 0.0
      %653 = vmatpush1.msra.mxu0 0.0
      %654 = vmatprep.subr.mxu0 0.0
      %655 = vmatpush1.msra.mxu0 0.0
      %656 = vmatprep.subr.mxu0 0.0
      %657 = vmatpush1.msra.mxu0 0.0
      %658 = vmatprep.subr.mxu0 0.0
      %659 = vmatpush1.msra.mxu0 0.0
      %660 = vmatprep.subr.mxu0 0.0
      %661 = vmatpush1.msra.mxu0 0.0
      %662 = vmatprep.subr.mxu0 0.0
      %663 = vmatpush1.msra.mxu0 0.0
      %664 = vmatprep.subr.mxu0 0.0
      %665 = vmatpush1.msra.mxu0 0.0
      %666 = vmatprep.subr.mxu0 0.0
      %667 = vmatpush1.msra.mxu0 0.0
      %668 = vmatprep.subr.mxu0 0.0
      %669 = vmatpush1.msra.mxu0 0.0
      %670 = vmatprep.subr.mxu0 0.0
      %671 = vmatpush1.msra.mxu0 0.0
      %672 = vmatprep.subr.mxu0 0.0
      %673 = vmatpush1.msra.mxu0 0.0
      %674 = vmatprep.mubr.f32.mxu0 0.0
      %675 = vmatmul.mubr.f32.gmra.mrb[0].mxu0 %v608
      %v676 = vpop.f32.mrb[0].mxu0
      %v677 = vadd.f32 %v605, %v676
      %v678 = vpop.f32.mrb[0].mxu0
      %679 = vdwg.mxu0
      %v680 = vmax.f32 %v677, 0.0
      %v681 = vld [vmem:[%s6] sm:$0xff]
      %v682 = vld [vmem:[%s6 + $0x8] sm:$0xff]
      %v683 = vld [vmem:[%s7] sm:$0x1]
      %vm684 = vcmask 130048
      %v686 = vsel %vm684, %v680, 0
      %688 = vmatprep.subr.mxu0 0.0
      %689 = vmatpush1.msra.mxu0 %v681
      %690 = vmatprep.subr.mxu0 0.0
      %691 = vmatpush1.msra.mxu0 %v682
      %692 = vmatprep.subr.mxu0 0.0
      %693 = vmatpush1.msra.mxu0 0.0
      %694 = vmatprep.subr.mxu0 0.0
      %695 = vmatpush1.msra.mxu0 0.0
      %696 = vmatprep.subr.mxu0 0.0
      %697 = vmatpush1.msra.mxu0 0.0
      %698 = vmatprep.subr.mxu0 0.0
      %699 = vmatpush1.msra.mxu0 0.0
      %700 = vmatprep.subr.mxu0 0.0
      %701 = vmatpush1.msra.mxu0 0.0
      %702 = vmatprep.subr.mxu0 0.0
      %703 = vmatpush1.msra.mxu0 0.0
      %704 = vmatprep.subr.mxu0 0.0
      %705 = vmatpush1.msra.mxu0 0.0
      %706 = vmatprep.subr.mxu0 0.0
      %707 = vmatpush1.msra.mxu0 0.0
      %708 = vmatprep.subr.mxu0 0.0
      %709 = vmatpush1.msra.mxu0 0.0
      %710 = vmatprep.subr.mxu0 0.0
      %711 = vmatpush1.msra.mxu0 0.0
      %712 = vmatprep.subr.mxu0 0.0
      %713 = vmatpush1.msra.mxu0 0.0
      %714 = vmatprep.subr.mxu0 0.0
      %715 = vmatpush1.msra.mxu0 0.0
      %716 = vmatprep.subr.mxu0 0.0
      %717 = vmatpush1.msra.mxu0 0.0
      %718 = vmatprep.subr.mxu0 0.0
      %719 = vmatpush1.msra.mxu0 0.0
      %720 = vmatprep.subr.mxu0 0.0
      %721 = vmatpush1.msra.mxu0 0.0
      %722 = vmatprep.subr.mxu0 0.0
      %723 = vmatpush1.msra.mxu0 0.0
      %724 = vmatprep.subr.mxu0 0.0
      %725 = vmatpush1.msra.mxu0 0.0
      %726 = vmatprep.subr.mxu0 0.0
      %727 = vmatpush1.msra.mxu0 0.0
      %728 = vmatprep.subr.mxu0 0.0
      %729 = vmatpush1.msra.mxu0 0.0
      %730 = vmatprep.subr.mxu0 0.0
      %731 = vmatpush1.msra.mxu0 0.0
      %732 = vmatprep.subr.mxu0 0.0
      %733 = vmatpush1.msra.mxu0 0.0
      %734 = vmatprep.subr.mxu0 0.0
      %735 = vmatpush1.msra.mxu0 0.0
      %736 = vmatprep.subr.mxu0 0.0
      %737 = vmatpush1.msra.mxu0 0.0
      %738 = vmatprep.subr.mxu0 0.0
      %739 = vmatpush1.msra.mxu0 0.0
      %740 = vmatprep.subr.mxu0 0.0
      %741 = vmatpush1.msra.mxu0 0.0
      %742 = vmatprep.subr.mxu0 0.0
      %743 = vmatpush1.msra.mxu0 0.0
      %744 = vmatprep.subr.mxu0 0.0
      %745 = vmatpush1.msra.mxu0 0.0
      %746 = vmatprep.subr.mxu0 0.0
      %747 = vmatpush1.msra.mxu0 0.0
      %748 = vmatprep.subr.mxu0 0.0
      %749 = vmatpush1.msra.mxu0 0.0
      %750 = vmatprep.subr.mxu0 0.0
      %751 = vmatpush1.msra.mxu0 0.0
      %752 = vmatprep.mubr.f32.mxu0 0.0
      %753 = vmatmul.mubr.f32.gmra.mrb[0].mxu0 %v686
      %v754 = vpop.f32.mrb[0].mxu0
      %v755 = vadd.f32 %v683, %v754
      %v756 = vpop.f32.mrb[0].mxu0
      %757 = vdwg.mxu0
      %v758 = vmax.f32 %v755, 0.0
      %759 = vst [vmem:[#allocation2] sm:$0xff] 0.0
      %760 = vst [vmem:[#allocation2 + $0x8] sm:$0xff] 0.0
      %761 = vst [vmem:[#allocation2 + $0x10] sm:$0x3] 0.0
      %v762 = vld [vmem:[%s8] sm:$0xff]
      %v763 = vld [vmem:[%s8 + $0x8] sm:$0xff]
      %v764 = vld [vmem:[%s8 + $0x10] sm:$0xff]
      %v765 = vld [vmem:[%s8 + $0x18] sm:$0xff]
      %v766 = vld [vmem:[%s9] sm:$0x1]
      %v768 = vsel %vm606, %v758, 0
      %770 = vmatprep.subr.mxu0 0.0
      %771 = vmatpush1.msra.mxu0 %v762
      %772 = vmatprep.subr.mxu0 0.0
      %773 = vmatpush1.msra.mxu0 %v763
      %774 = vmatprep.subr.mxu0 0.0
      %775 = vmatpush1.msra.mxu0 %v764
      %776 = vmatprep.subr.mxu0 0.0
      %777 = vmatpush1.msra.mxu0 %v765
      %778 = vmatprep.subr.mxu0 0.0
      %779 = vmatpush1.msra.mxu0 0.0
      %780 = vmatprep.subr.mxu0 0.0
      %781 = vmatpush1.msra.mxu0 0.0
      %782 = vmatprep.subr.mxu0 0.0
      %783 = vmatpush1.msra.mxu0 0.0
      %784 = vmatprep.subr.mxu0 0.0
      %785 = vmatpush1.msra.mxu0 0.0
      %786 = vmatprep.subr.mxu0 0.0
      %787 = vmatpush1.msra.mxu0 0.0
      %788 = vmatprep.subr.mxu0 0.0
      %789 = vmatpush1.msra.mxu0 0.0
      %790 = vmatprep.subr.mxu0 0.0
      %791 = vmatpush1.msra.mxu0 0.0
      %792 = vmatprep.subr.mxu0 0.0
      %793 = vmatpush1.msra.mxu0 0.0
      %794 = vmatprep.subr.mxu0 0.0
      %795 = vmatpush1.msra.mxu0 0.0
      %796 = vmatprep.subr.mxu0 0.0
      %797 = vmatpush1.msra.mxu0 0.0
      %798 = vmatprep.subr.mxu0 0.0
      %799 = vmatpush1.msra.mxu0 0.0
      %800 = vmatprep.subr.mxu0 0.0
      %801 = vmatpush1.msra.mxu0 0.0
      %802 = vmatprep.subr.mxu0 0.0
      %803 = vmatpush1.msra.mxu0 0.0
      %804 = vmatprep.subr.mxu0 0.0
      %805 = vmatpush1.msra.mxu0 0.0
      %806 = vmatprep.subr.mxu0 0.0
      %807 = vmatpush1.msra.mxu0 0.0
      %808 = vmatprep.subr.mxu0 0.0
      %809 = vmatpush1.msra.mxu0 0.0
      %810 = vmatprep.subr.mxu0 0.0
      %811 = vmatpush1.msra.mxu0 0.0
      %812 = vmatprep.subr.mxu0 0.0
      %813 = vmatpush1.msra.mxu0 0.0
      %814 = vmatprep.subr.mxu0 0.0
      %815 = vmatpush1.msra.mxu0 0.0
      %816 = vmatprep.subr.mxu0 0.0
      %817 = vmatpush1.msra.mxu0 0.0
      %818 = vmatprep.subr.mxu0 0.0
      %819 = vmatpush1.msra.mxu0 0.0
      %820 = vmatprep.subr.mxu0 0.0
      %821 = vmatpush1.msra.mxu0 0.0
      %822 = vmatprep.subr.mxu0 0.0
      %823 = vmatpush1.msra.mxu0 0.0
      %824 = vmatprep.subr.mxu0 0.0
      %825 = vmatpush1.msra.mxu0 0.0
      %826 = vmatprep.subr.mxu0 0.0
      %827 = vmatpush1.msra.mxu0 0.0
      %828 = vmatprep.subr.mxu0 0.0
      %829 = vmatpush1.msra.mxu0 0.0
      %830 = vmatprep.subr.mxu0 0.0
      %831 = vmatpush1.msra.mxu0 0.0
      %832 = vmatprep.subr.mxu0 0.0
      %833 = vmatpush1.msra.mxu0 0.0
      %834 = vmatprep.mubr.f32.mxu0 0.0
      %835 = vmatmul.mubr.f32.gmra.mrb[0].mxu0 %v768
      %v836 = vpop.f32.mrb[0].mxu0
      %v837 = vadd.f32 %v766, %v836
      %v838 = vpop.f32.mrb[0].mxu0
      %839 = vdwg.mxu0
      %v840 = vmax.f32 %v837, 0.0
      %v841 = vlaneseq
      %v842 = vshrl.u32 %v841, 7
      %v843 = vsub.s32 0, %v842
      %v844 = vrot.slane %v840, %v843
      %845 = vst [vmem:[#allocation2 + $0x1] sm:$0xf] %v844
      %s846 = scalar_lea.vmem %s8, 32
      %v847 = vld [vmem:[%s846] sm:$0xff]
      %v848 = vld [vmem:[%s846 + $0x8] sm:$0xff]
      %v849 = vld [vmem:[%s846 + $0x10] sm:$0xff]
      %v850 = vld [vmem:[%s846 + $0x18] sm:$0xff]
      %v851 = vld [vmem:[%s9] sm:$0x1]
      %852 = vmatprep.subr.mxu0 0.0
      %853 = vmatpush1.msra.mxu0 %v847
      %854 = vmatprep.subr.mxu0 0.0
      %855 = vmatpush1.msra.mxu0 %v848
      %856 = vmatprep.subr.mxu0 0.0
      %857 = vmatpush1.msra.mxu0 %v849
      %858 = vmatprep.subr.mxu0 0.0
      %859 = vmatpush1.msra.mxu0 %v850
      %860 = vmatprep.subr.mxu0 0.0
      %861 = vmatpush1.msra.mxu0 0.0
      %862 = vmatprep.subr.mxu0 0.0
      %863 = vmatpush1.msra.mxu0 0.0
      %864 = vmatprep.subr.mxu0 0.0
      %865 = vmatpush1.msra.mxu0 0.0
      %866 = vmatprep.subr.mxu0 0.0
      %867 = vmatpush1.msra.mxu0 0.0
      %868 = vmatprep.subr.mxu0 0.0
      %869 = vmatpush1.msra.mxu0 0.0
      %870 = vmatprep.subr.mxu0 0.0
      %871 = vmatpush1.msra.mxu0 0.0
      %872 = vmatprep.subr.mxu0 0.0
      %873 = vmatpush1.msra.mxu0 0.0
      %874 = vmatprep.subr.mxu0 0.0
      %875 = vmatpush1.msra.mxu0 0.0
      %876 = vmatprep.subr.mxu0 0.0
      %877 = vmatpush1.msra.mxu0 0.0
      %878 = vmatprep.subr.mxu0 0.0
      %879 = vmatpush1.msra.mxu0 0.0
      %880 = vmatprep.subr.mxu0 0.0
      %881 = vmatpush1.msra.mxu0 0.0
      %882 = vmatprep.subr.mxu0 0.0
      %883 = vmatpush1.msra.mxu0 0.0
      %884 = vmatprep.subr.mxu0 0.0
      %885 = vmatpush1.msra.mxu0 0.0
      %886 = vmatprep.subr.mxu0 0.0
      %887 = vmatpush1.msra.mxu0 0.0
      %888 = vmatprep.subr.mxu0 0.0
      %889 = vmatpush1.msra.mxu0 0.0
      %890 = vmatprep.subr.mxu0 0.0
      %891 = vmatpush1.msra.mxu0 0.0
      %892 = vmatprep.subr.mxu0 0.0
      %893 = vmatpush1.msra.mxu0 0.0
      %894 = vmatprep.subr.mxu0 0.0
      %895 = vmatpush1.msra.mxu0 0.0
      %896 = vmatprep.subr.mxu0 0.0
      %897 = vmatpush1.msra.mxu0 0.0
      %898 = vmatprep.subr.mxu0 0.0
      %899 = vmatpush1.msra.mxu0 0.0
      %900 = vmatprep.subr.mxu0 0.0
      %901 = vmatpush1.msra.mxu0 0.0
      %902 = vmatprep.subr.mxu0 0.0
      %903 = vmatpush1.msra.mxu0 0.0
      %904 = vmatprep.subr.mxu0 0.0
      %905 = vmatpush1.msra.mxu0 0.0
      %906 = vmatprep.subr.mxu0 0.0
      %907 = vmatpush1.msra.mxu0 0.0
      %908 = vmatprep.subr.mxu0 0.0
      %909 = vmatpush1.msra.mxu0 0.0
      %910 = vmatprep.subr.mxu0 0.0
      %911 = vmatpush1.msra.mxu0 0.0
      %912 = vmatprep.subr.mxu0 0.0
      %913 = vmatpush1.msra.mxu0 0.0
      %914 = vmatprep.subr.mxu0 0.0
      %915 = vmatpush1.msra.mxu0 0.0
      %916 = vmatprep.mubr.f32.mxu0 0.0
      %917 = vmatmul.mubr.f32.gmra.mrb[0].mxu0 %v768
      %v918 = vpop.f32.mrb[0].mxu0
      %v919 = vadd.f32 %v851, %v918
      %v920 = vpop.f32.mrb[0].mxu0
      %921 = vdwg.mxu0
      %v922 = vmax.f32 %v919, 0.0
      %v923 = vlaneseq
      %v924 = vshrl.u32 %v923, 7
      %v925 = vsub.s32 0, %v924
      %v926 = vrot.slane %v922, %v925
      %927 = vst [vmem:[#allocation2 + $0x5] sm:$0xf] %v926
      %s928 = scalar_lea.vmem %s8, 64
      %v929 = vld [vmem:[%s928] sm:$0xff]
      %v930 = vld [vmem:[%s928 + $0x8] sm:$0xff]
      %v931 = vld [vmem:[%s928 + $0x10] sm:$0xff]
      %v932 = vld [vmem:[%s928 + $0x18] sm:$0xff]
      %v933 = vld [vmem:[%s9] sm:$0x1]
      %934 = vmatprep.subr.mxu0 0.0
      %935 = vmatpush1.msra.mxu0 %v929
      %936 = vmatprep.subr.mxu0 0.0
      %937 = vmatpush1.msra.mxu0 %v930
      %938 = vmatprep.subr.mxu0 0.0
      %939 = vmatpush1.msra.mxu0 %v931
      %940 = vmatprep.subr.mxu0 0.0
      %941 = vmatpush1.msra.mxu0 %v932
      %942 = vmatprep.subr.mxu0 0.0
      %943 = vmatpush1.msra.mxu0 0.0
      %944 = vmatprep.subr.mxu0 0.0
      %945 = vmatpush1.msra.mxu0 0.0
      %946 = vmatprep.subr.mxu0 0.0
      %947 = vmatpush1.msra.mxu0 0.0
      %948 = vmatprep.subr.mxu0 0.0
      %949 = vmatpush1.msra.mxu0 0.0
      %950 = vmatprep.subr.mxu0 0.0
      %951 = vmatpush1.msra.mxu0 0.0
      %952 = vmatprep.subr.mxu0 0.0
      %953 = vmatpush1.msra.mxu0 0.0
      %954 = vmatprep.subr.mxu0 0.0
      %955 = vmatpush1.msra.mxu0 0.0
      %956 = vmatprep.subr.mxu0 0.0
      %957 = vmatpush1.msra.mxu0 0.0
      %958 = vmatprep.subr.mxu0 0.0
      %959 = vmatpush1.msra.mxu0 0.0
      %960 = vmatprep.subr.mxu0 0.0
      %961 = vmatpush1.msra.mxu0 0.0
      %962 = vmatprep.subr.mxu0 0.0
      %963 = vmatpush1.msra.mxu0 0.0
      %964 = vmatprep.subr.mxu0 0.0
      %965 = vmatpush1.msra.mxu0 0.0
      %966 = vmatprep.subr.mxu0 0.0
      %967 = vmatpush1.msra.mxu0 0.0
      %968 = vmatprep.subr.mxu0 0.0
      %969 = vmatpush1.msra.mxu0 0.0
      %970 = vmatprep.subr.mxu0 0.0
      %971 = vmatpush1.msra.mxu0 0.0
      %972 = vmatprep.subr.mxu0 0.0
      %973 = vmatpush1.msra.mxu0 0.0
      %974 = vmatprep.subr.mxu0 0.0
      %975 = vmatpush1.msra.mxu0 0.0
      %976 = vmatprep.subr.mxu0 0.0
      %977 = vmatpush1.msra.mxu0 0.0
      %978 = vmatprep.subr.mxu0 0.0
      %979 = vmatpush1.msra.mxu0 0.0
      %980 = vmatprep.subr.mxu0 0.0
      %981 = vmatpush1.msra.mxu0 0.0
      %982 = vmatprep.subr.mxu0 0.0
      %983 = vmatpush1.msra.mxu0 0.0
      %984 = vmatprep.subr.mxu0 0.0
      %985 = vmatpush1.msra.mxu0 0.0
      %986 = vmatprep.subr.mxu0 0.0
      %987 = vmatpush1.msra.mxu0 0.0
      %988 = vmatprep.subr.mxu0 0.0
      %989 = vmatpush1.msra.mxu0 0.0
      %990 = vmatprep.subr.mxu0 0.0
      %991 = vmatpush1.msra.mxu0 0.0
      %992 = vmatprep.subr.mxu0 0.0
      %993 = vmatpush1.msra.mxu0 0.0
      %994 = vmatprep.subr.mxu0 0.0
      %995 = vmatpush1.msra.mxu0 0.0
      %996 = vmatprep.subr.mxu0 0.0
      %997 = vmatpush1.msra.mxu0 0.0
      %998 = vmatprep.mubr.f32.mxu0 0.0
      %999 = vmatmul.mubr.f32.gmra.mrb[0].mxu0 %v768
      %v1000 = vpop.f32.mrb[0].mxu0
      %v1001 = vadd.f32 %v933, %v1000
      %v1002 = vpop.f32.mrb[0].mxu0
      %1003 = vdwg.mxu0
      %v1004 = vmax.f32 %v1001, 0.0
      %v1005 = vlaneseq
      %v1006 = vshrl.u32 %v1005, 7
      %v1007 = vsub.s32 0, %v1006
      %v1008 = vrot.slane %v1004, %v1007
      %1009 = vst [vmem:[#allocation2 + $0x9] sm:$0xf] %v1008
      %s1010 = scalar_lea.vmem %s8, 96
      %v1011 = vld [vmem:[%s1010] sm:$0xff]
      %v1012 = vld [vmem:[%s1010 + $0x8] sm:$0xff]
      %v1013 = vld [vmem:[%s1010 + $0x10] sm:$0xff]
      %v1014 = vld [vmem:[%s1010 + $0x18] sm:$0xff]
      %v1015 = vld [vmem:[%s9] sm:$0x1]
      %1016 = vmatprep.subr.mxu0 0.0
      %1017 = vmatpush1.msra.mxu0 %v1011
      %1018 = vmatprep.subr.mxu0 0.0
      %1019 = vmatpush1.msra.mxu0 %v1012
      %1020 = vmatprep.subr.mxu0 0.0
      %1021 = vmatpush1.msra.mxu0 %v1013
      %1022 = vmatprep.subr.mxu0 0.0
      %1023 = vmatpush1.msra.mxu0 %v1014
      %1024 = vmatprep.subr.mxu0 0.0
      %1025 = vmatpush1.msra.mxu0 0.0
      %1026 = vmatprep.subr.mxu0 0.0
      %1027 = vmatpush1.msra.mxu0 0.0
      %1028 = vmatprep.subr.mxu0 0.0
      %1029 = vmatpush1.msra.mxu0 0.0
      %1030 = vmatprep.subr.mxu0 0.0
      %1031 = vmatpush1.msra.mxu0 0.0
      %1032 = vmatprep.subr.mxu0 0.0
      %1033 = vmatpush1.msra.mxu0 0.0
      %1034 = vmatprep.subr.mxu0 0.0
      %1035 = vmatpush1.msra.mxu0 0.0
      %1036 = vmatprep.subr.mxu0 0.0
      %1037 = vmatpush1.msra.mxu0 0.0
      %1038 = vmatprep.subr.mxu0 0.0
      %1039 = vmatpush1.msra.mxu0 0.0
      %1040 = vmatprep.subr.mxu0 0.0
      %1041 = vmatpush1.msra.mxu0 0.0
      %1042 = vmatprep.subr.mxu0 0.0
      %1043 = vmatpush1.msra.mxu0 0.0
      %1044 = vmatprep.subr.mxu0 0.0
      %1045 = vmatpush1.msra.mxu0 0.0
      %1046 = vmatprep.subr.mxu0 0.0
      %1047 = vmatpush1.msra.mxu0 0.0
      %1048 = vmatprep.subr.mxu0 0.0
      %1049 = vmatpush1.msra.mxu0 0.0
      %1050 = vmatprep.subr.mxu0 0.0
      %1051 = vmatpush1.msra.mxu0 0.0
      %1052 = vmatprep.subr.mxu0 0.0
      %1053 = vmatpush1.msra.mxu0 0.0
      %1054 = vmatprep.subr.mxu0 0.0
      %1055 = vmatpush1.msra.mxu0 0.0
      %1056 = vmatprep.subr.mxu0 0.0
      %1057 = vmatpush1.msra.mxu0 0.0
      %1058 = vmatprep.subr.mxu0 0.0
      %1059 = vmatpush1.msra.mxu0 0.0
      %1060 = vmatprep.subr.mxu0 0.0
      %1061 = vmatpush1.msra.mxu0 0.0
      %1062 = vmatprep.subr.mxu0 0.0
      %1063 = vmatpush1.msra.mxu0 0.0
      %1064 = vmatprep.subr.mxu0 0.0
      %1065 = vmatpush1.msra.mxu0 0.0
      %1066 = vmatprep.subr.mxu0 0.0
      %1067 = vmatpush1.msra.mxu0 0.0
      %1068 = vmatprep.subr.mxu0 0.0
      %1069 = vmatpush1.msra.mxu0 0.0
      %1070 = vmatprep.subr.mxu0 0.0
      %1071 = vmatpush1.msra.mxu0 0.0
      %1072 = vmatprep.subr.mxu0 0.0
      %1073 = vmatpush1.msra.mxu0 0.0
      %1074 = vmatprep.subr.mxu0 0.0
      %1075 = vmatpush1.msra.mxu0 0.0
      %1076 = vmatprep.subr.mxu0 0.0
      %1077 = vmatpush1.msra.mxu0 0.0
      %1078 = vmatprep.subr.mxu0 0.0
      %1079 = vmatpush1.msra.mxu0 0.0
      %1080 = vmatprep.mubr.f32.mxu0 0.0
      %1081 = vmatmul.mubr.f32.gmra.mrb[0].mxu0 %v768
      %v1082 = vpop.f32.mrb[0].mxu0
      %v1083 = vadd.f32 %v1015, %v1082
      %v1084 = vpop.f32.mrb[0].mxu0
      %1085 = vdwg.mxu0
      %v1086 = vmax.f32 %v1083, 0.0
      %v1087 = vlaneseq
      %v1088 = vshrl.u32 %v1087, 7
      %v1089 = vsub.s32 0, %v1088
      %v1090 = vrot.slane %v1086, %v1089
      %1091 = vst [vmem:[#allocation2 + $0xd] sm:$0xf] %v1090
      %v1092 = vld [vmem:[#allocation2] sm:$0xff]
      %v1093 = vld [vmem:[#allocation2 + $0x8] sm:$0xff]
      %v1094 = vld [vmem:[#allocation2 + $0x10] sm:$0x3]
      %v1095 = vld [vmem:[%s10] sm:$0xff]
      %v1096 = vld [vmem:[%s10 + $0x8] sm:$0xff]
      %v1097 = vld [vmem:[%s10 + $0x10] sm:$0xff]
      %v1098 = vld [vmem:[%s10 + $0x18] sm:$0xff]
      %v1099 = vld [vmem:[%s10 + $0x20] sm:$0xff]
      %v1100 = vld [vmem:[%s10 + $0x28] sm:$0xff]
      %v1101 = vld [vmem:[%s10 + $0x30] sm:$0xff]
      %v1102 = vld [vmem:[%s10 + $0x38] sm:$0xff]
      %v1103 = vld [vmem:[%s10 + $0x40] sm:$0xff]
      %v1104 = vld [vmem:[%s10 + $0x48] sm:$0xff]
      %v1105 = vld [vmem:[%s10 + $0x50] sm:$0xff]
      %v1106 = vld [vmem:[%s10 + $0x58] sm:$0xff]
      %v1107 = vld [vmem:[%s10 + $0x60] sm:$0xff]
      %v1108 = vld [vmem:[%s10 + $0x68] sm:$0xff]
      %v1109 = vld [vmem:[%s10 + $0x70] sm:$0xff]
      %v1110 = vld [vmem:[%s10 + $0x78] sm:$0xff]
      %s1111 = scalar_lea.vmem %s10, 128
      %v1112 = vld [vmem:[%s1111] sm:$0xff]
      %v1113 = vld [vmem:[%s1111 + $0x8] sm:$0xff]
      %v1114 = vld [vmem:[%s1111 + $0x10] sm:$0xff]
      %v1115 = vld [vmem:[%s1111 + $0x18] sm:$0xff]
      %v1116 = vld [vmem:[%s1111 + $0x20] sm:$0xff]
      %v1117 = vld [vmem:[%s1111 + $0x28] sm:$0xff]
      %v1118 = vld [vmem:[%s1111 + $0x30] sm:$0xff]
      %v1119 = vld [vmem:[%s1111 + $0x38] sm:$0xff]
      %v1120 = vld [vmem:[%s1111 + $0x40] sm:$0xff]
      %v1121 = vld [vmem:[%s1111 + $0x48] sm:$0xff]
      %v1122 = vld [vmem:[%s1111 + $0x50] sm:$0xff]
      %v1123 = vld [vmem:[%s1111 + $0x58] sm:$0xff]
      %v1124 = vld [vmem:[%s1111 + $0x60] sm:$0xff]
      %v1125 = vld [vmem:[%s1111 + $0x68] sm:$0xff]
      %v1126 = vld [vmem:[%s1111 + $0x70] sm:$0xff]
      %v1127 = vld [vmem:[%s1111 + $0x78] sm:$0xff]
      %vm1131 = vcmask 1046528
      %v1132 = vrot.slane %v1092, 1
      %v1133 = vrot.slane %v1093, 1
      %v1134 = vsel %vm1131, %v1132, %v1133
      %v1135 = vrot.slane %v1094, 1
      %v1136 = vsel %vm1131, %v1133, %v1135
      %1139 = vmatprep.subr.mxu0 0.0
      %1140 = vmatpush1.msra.mxu0 %v1112
      %1141 = vmatprep.subr.mxu0 0.0
      %1142 = vmatpush1.msra.mxu0 %v1113
      %1143 = vmatprep.subr.mxu0 0.0
      %1144 = vmatpush1.msra.mxu0 %v1114
      %1145 = vmatprep.subr.mxu0 0.0
      %1146 = vmatpush1.msra.mxu0 %v1115
      %1147 = vmatprep.subr.mxu0 0.0
      %1148 = vmatpush1.msra.mxu0 %v1116
      %1149 = vmatprep.subr.mxu0 0.0
      %1150 = vmatpush1.msra.mxu0 %v1117
      %1151 = vmatprep.subr.mxu0 0.0
      %1152 = vmatpush1.msra.mxu0 %v1118
      %1153 = vmatprep.subr.mxu0 0.0
      %1154 = vmatpush1.msra.mxu0 %v1119
      %1155 = vmatprep.subr.mxu0 0.0
      %1156 = vmatpush1.msra.mxu0 %v1120
      %1157 = vmatprep.subr.mxu0 0.0
      %1158 = vmatpush1.msra.mxu0 %v1121
      %1159 = vmatprep.subr.mxu0 0.0
      %1160 = vmatpush1.msra.mxu0 %v1122
      %1161 = vmatprep.subr.mxu0 0.0
      %1162 = vmatpush1.msra.mxu0 %v1123
      %1163 = vmatprep.subr.mxu0 0.0
      %1164 = vmatpush1.msra.mxu0 %v1124
      %1165 = vmatprep.subr.mxu0 0.0
      %1166 = vmatpush1.msra.mxu0 %v1125
      %1167 = vmatprep.subr.mxu0 0.0
      %1168 = vmatpush1.msra.mxu0 %v1126
      %1169 = vmatprep.subr.mxu0 0.0
      %1170 = vmatpush1.msra.mxu0 %v1127
      %1171 = vmatprep.subr.mxu0 0.0
      %1172 = vmatpush1.msra.mxu0 0.0
      %1173 = vmatprep.subr.mxu0 0.0
      %1174 = vmatpush1.msra.mxu0 0.0
      %1175 = vmatprep.subr.mxu0 0.0
      %1176 = vmatpush1.msra.mxu0 0.0
      %1177 = vmatprep.subr.mxu0 0.0
      %1178 = vmatpush1.msra.mxu0 0.0
      %1179 = vmatprep.subr.mxu0 0.0
      %1180 = vmatpush1.msra.mxu0 0.0
      %1181 = vmatprep.subr.mxu0 0.0
      %1182 = vmatpush1.msra.mxu0 0.0
      %1183 = vmatprep.subr.mxu0 0.0
      %1184 = vmatpush1.msra.mxu0 0.0
      %1185 = vmatprep.subr.mxu0 0.0
      %1186 = vmatpush1.msra.mxu0 0.0
      %1187 = vmatprep.subr.mxu0 0.0
      %1188 = vmatpush1.msra.mxu0 0.0
      %1189 = vmatprep.subr.mxu0 0.0
      %1190 = vmatpush1.msra.mxu0 0.0
      %1191 = vmatprep.subr.mxu0 0.0
      %1192 = vmatpush1.msra.mxu0 0.0
      %1193 = vmatprep.subr.mxu0 0.0
      %1194 = vmatpush1.msra.mxu0 0.0
      %1195 = vmatprep.subr.mxu0 0.0
      %1196 = vmatpush1.msra.mxu0 0.0
      %1197 = vmatprep.subr.mxu0 0.0
      %1198 = vmatpush1.msra.mxu0 0.0
      %1199 = vmatprep.subr.mxu0 0.0
      %1200 = vmatpush1.msra.mxu0 0.0
      %1201 = vmatprep.subr.mxu0 0.0
      %1202 = vmatpush1.msra.mxu0 0.0
      %1203 = vmatprep.mubr.f32.mxu0 0.0
      %1204 = vmatmul.mubr.f32.gmra.mrb[0].mxu0 %v1134
      %v1205 = vpop.f32.mrb[0].mxu0
      %v1206 = vadd.f32 0.0, %v1205
      %v1207 = vpop.f32.mrb[0].mxu0
      %1208 = vmatprep.mubr.f32.mxu0 0.0
      %1209 = vmatmul.mubr.f32.gmra.mrb[0].mxu0 %v1136
      %v1210 = vpop.f32.mrb[0].mxu0
      %v1211 = vadd.f32 0.0, %v1210
      %v1212 = vpop.f32.mrb[0].mxu0
      %1213 = vdwg.mxu0
      %1214 = vmatprep.subr.mxu0 0.0
      %1215 = vmatpush1.msra.mxu0 %v1095
      %1216 = vmatprep.subr.mxu0 0.0
      %1217 = vmatpush1.msra.mxu0 %v1096
      %1218 = vmatprep.subr.mxu0 0.0
      %1219 = vmatpush1.msra.mxu0 %v1097
      %1220 = vmatprep.subr.mxu0 0.0
      %1221 = vmatpush1.msra.mxu0 %v1098
      %1222 = vmatprep.subr.mxu0 0.0
      %1223 = vmatpush1.msra.mxu0 %v1099
      %1224 = vmatprep.subr.mxu0 0.0
      %1225 = vmatpush1.msra.mxu0 %v1100
      %1226 = vmatprep.subr.mxu0 0.0
      %1227 = vmatpush1.msra.mxu0 %v1101
      %1228 = vmatprep.subr.mxu0 0.0
      %1229 = vmatpush1.msra.mxu0 %v1102
      %1230 = vmatprep.subr.mxu0 0.0
      %1231 = vmatpush1.msra.mxu0 %v1103
      %1232 = vmatprep.subr.mxu0 0.0
      %1233 = vmatpush1.msra.mxu0 %v1104
      %1234 = vmatprep.subr.mxu0 0.0
      %1235 = vmatpush1.msra.mxu0 %v1105
      %1236 = vmatprep.subr.mxu0 0.0
      %1237 = vmatpush1.msra.mxu0 %v1106
      %1238 = vmatprep.subr.mxu0 0.0
      %1239 = vmatpush1.msra.mxu0 %v1107
      %1240 = vmatprep.subr.mxu0 0.0
      %1241 = vmatpush1.msra.mxu0 %v1108
      %1242 = vmatprep.subr.mxu0 0.0
      %1243 = vmatpush1.msra.mxu0 %v1109
      %1244 = vmatprep.subr.mxu0 0.0
      %1245 = vmatpush1.msra.mxu0 %v1110
      %1246 = vmatprep.subr.mxu0 0.0
      %1247 = vmatpush1.msra.mxu0 0.0
      %1248 = vmatprep.subr.mxu0 0.0
      %1249 = vmatpush1.msra.mxu0 0.0
      %1250 = vmatprep.subr.mxu0 0.0
      %1251 = vmatpush1.msra.mxu0 0.0
      %1252 = vmatprep.subr.mxu0 0.0
      %1253 = vmatpush1.msra.mxu0 0.0
      %1254 = vmatprep.subr.mxu0 0.0
      %1255 = vmatpush1.msra.mxu0 0.0
      %1256 = vmatprep.subr.mxu0 0.0
      %1257 = vmatpush1.msra.mxu0 0.0
      %1258 = vmatprep.subr.mxu0 0.0
      %1259 = vmatpush1.msra.mxu0 0.0
      %1260 = vmatprep.subr.mxu0 0.0
      %1261 = vmatpush1.msra.mxu0 0.0
      %1262 = vmatprep.subr.mxu0 0.0
      %1263 = vmatpush1.msra.mxu0 0.0
      %1264 = vmatprep.subr.mxu0 0.0
      %1265 = vmatpush1.msra.mxu0 0.0
      %1266 = vmatprep.subr.mxu0 0.0
      %1267 = vmatpush1.msra.mxu0 0.0
      %1268 = vmatprep.subr.mxu0 0.0
      %1269 = vmatpush1.msra.mxu0 0.0
      %1270 = vmatprep.subr.mxu0 0.0
      %1271 = vmatpush1.msra.mxu0 0.0
      %1272 = vmatprep.subr.mxu0 0.0
      %1273 = vmatpush1.msra.mxu0 0.0
      %1274 = vmatprep.subr.mxu0 0.0
      %1275 = vmatpush1.msra.mxu0 0.0
      %1276 = vmatprep.subr.mxu0 0.0
      %1277 = vmatpush1.msra.mxu0 0.0
      %1278 = vmatprep.mubr.f32.mxu0 0.0
      %1279 = vmatmul.mubr.f32.gmra.mrb[0].mxu0 %v1092
      %v1280 = vpop.f32.mrb[0].mxu0
      %v1281 = vadd.f32 %v1206, %v1280
      %v1282 = vpop.f32.mrb[0].mxu0
      %1283 = vmatprep.mubr.f32.mxu0 0.0
      %1284 = vmatmul.mubr.f32.gmra.mrb[0].mxu0 %v1093
      %v1285 = vpop.f32.mrb[0].mxu0
      %v1286 = vadd.f32 %v1211, %v1285
      %v1287 = vpop.f32.mrb[0].mxu0
      %1288 = vdwg.mxu0
      %s1289 = scalar_lea.vmem %s10, 256
      %v1290 = vld [vmem:[%s1289] sm:$0xff]
      %v1291 = vld [vmem:[%s1289 + $0x8] sm:$0xff]
      %v1292 = vld [vmem:[%s1289 + $0x10] sm:$0xff]
      %v1293 = vld [vmem:[%s1289 + $0x18] sm:$0xff]
      %v1294 = vld [vmem:[%s1289 + $0x20] sm:$0xff]
      %v1295 = vld [vmem:[%s1289 + $0x28] sm:$0xff]
      %v1296 = vld [vmem:[%s1289 + $0x30] sm:$0xff]
      %v1297 = vld [vmem:[%s1289 + $0x38] sm:$0xff]
      %v1298 = vld [vmem:[%s1289 + $0x40] sm:$0xff]
      %v1299 = vld [vmem:[%s1289 + $0x48] sm:$0xff]
      %v1300 = vld [vmem:[%s1289 + $0x50] sm:$0xff]
      %v1301 = vld [vmem:[%s1289 + $0x58] sm:$0xff]
      %v1302 = vld [vmem:[%s1289 + $0x60] sm:$0xff]
      %v1303 = vld [vmem:[%s1289 + $0x68] sm:$0xff]
      %v1304 = vld [vmem:[%s1289 + $0x70] sm:$0xff]
      %v1305 = vld [vmem:[%s1289 + $0x78] sm:$0xff]
      %vm1306 = vcmask 1045504
      %v1307 = vrot.slane %v1092, 2
      %v1308 = vrot.slane %v1093, 2
      %v1309 = vsel %vm1306, %v1307, %v1308
      %v1310 = vrot.slane %v1094, 2
      %v1311 = vsel %vm1306, %v1308, %v1310
      %1314 = vmatprep.subr.mxu0 0.0
      %1315 = vmatpush1.msra.mxu0 %v1290
      %1316 = vmatprep.subr.mxu0 0.0
      %1317 = vmatpush1.msra.mxu0 %v1291
      %1318 = vmatprep.subr.mxu0 0.0
      %1319 = vmatpush1.msra.mxu0 %v1292
      %1320 = vmatprep.subr.mxu0 0.0
      %1321 = vmatpush1.msra.mxu0 %v1293
      %1322 = vmatprep.subr.mxu0 0.0
      %1323 = vmatpush1.msra.mxu0 %v1294
      %1324 = vmatprep.subr.mxu0 0.0
      %1325 = vmatpush1.msra.mxu0 %v1295
      %1326 = vmatprep.subr.mxu0 0.0
      %1327 = vmatpush1.msra.mxu0 %v1296
      %1328 = vmatprep.subr.mxu0 0.0
      %1329 = vmatpush1.msra.mxu0 %v1297
      %1330 = vmatprep.subr.mxu0 0.0
      %1331 = vmatpush1.msra.mxu0 %v1298
      %1332 = vmatprep.subr.mxu0 0.0
      %1333 = vmatpush1.msra.mxu0 %v1299
      %1334 = vmatprep.subr.mxu0 0.0
      %1335 = vmatpush1.msra.mxu0 %v1300
      %1336 = vmatprep.subr.mxu0 0.0
      %1337 = vmatpush1.msra.mxu0 %v1301
      %1338 = vmatprep.subr.mxu0 0.0
      %1339 = vmatpush1.msra.mxu0 %v1302
      %1340 = vmatprep.subr.mxu0 0.0
      %1341 = vmatpush1.msra.mxu0 %v1303
      %1342 = vmatprep.subr.mxu0 0.0
      %1343 = vmatpush1.msra.mxu0 %v1304
      %1344 = vmatprep.subr.mxu0 0.0
      %1345 = vmatpush1.msra.mxu0 %v1305
      %1346 = vmatprep.subr.mxu0 0.0
      %1347 = vmatpush1.msra.mxu0 0.0
      %1348 = vmatprep.subr.mxu0 0.0
      %1349 = vmatpush1.msra.mxu0 0.0
      %1350 = vmatprep.subr.mxu0 0.0
      %1351 = vmatpush1.msra.mxu0 0.0
      %1352 = vmatprep.subr.mxu0 0.0
      %1353 = vmatpush1.msra.mxu0 0.0
      %1354 = vmatprep.subr.mxu0 0.0
      %1355 = vmatpush1.msra.mxu0 0.0
      %1356 = vmatprep.subr.mxu0 0.0
      %1357 = vmatpush1.msra.mxu0 0.0
      %1358 = vmatprep.subr.mxu0 0.0
      %1359 = vmatpush1.msra.mxu0 0.0
      %1360 = vmatprep.subr.mxu0 0.0
      %1361 = vmatpush1.msra.mxu0 0.0
      %1362 = vmatprep.subr.mxu0 0.0
      %1363 = vmatpush1.msra.mxu0 0.0
      %1364 = vmatprep.subr.mxu0 0.0
      %1365 = vmatpush1.msra.mxu0 0.0
      %1366 = vmatprep.subr.mxu0 0.0
      %1367 = vmatpush1.msra.mxu0 0.0
      %1368 = vmatprep.subr.mxu0 0.0
      %1369 = vmatpush1.msra.mxu0 0.0
      %1370 = vmatprep.subr.mxu0 0.0
      %1371 = vmatpush1.msra.mxu0 0.0
      %1372 = vmatprep.subr.mxu0 0.0
      %1373 = vmatpush1.msra.mxu0 0.0
      %1374 = vmatprep.subr.mxu0 0.0
      %1375 = vmatpush1.msra.mxu0 0.0
      %1376 = vmatprep.subr.mxu0 0.0
      %1377 = vmatpush1.msra.mxu0 0.0
      %1378 = vmatprep.mubr.f32.mxu0 0.0
      %1379 = vmatmul.mubr.f32.gmra.mrb[0].mxu0 %v1309
      %v1380 = vpop.f32.mrb[0].mxu0
      %v1381 = vadd.f32 0.0, %v1380
      %v1382 = vpop.f32.mrb[0].mxu0
      %1383 = vmatprep.mubr.f32.mxu0 0.0
      %1384 = vmatmul.mubr.f32.gmra.mrb[0].mxu0 %v1311
      %v1385 = vpop.f32.mrb[0].mxu0
      %v1386 = vadd.f32 0.0, %v1385
      %v1387 = vpop.f32.mrb[0].mxu0
      %1388 = vdwg.mxu0
      %v1389 = vadd.f32 %v1281, %v1381
      %v1390 = vadd.f32 %v1286, %v1386
      %v1391 = vld [vmem:[%s11] sm:$0x1]
      %v1393 = vlaneseq
      %v1394 = vshrl.u32 %v1393, 7
      %v1395 = vsub.s32 0, %v1394
      %v1396 = vrot.slane %v1391, %v1395
      %v1398 = vadd.f32 %v1389, %v1396
      %v1399 = vadd.f32 %v1390, %v1396
      %v1400 = vmax.f32 %v1398, 0.0
      %v1401 = vmax.f32 %v1399, 0.0
      %1402 = vst [vmem:[#allocation2 + $0x1] sm:$0xff] %v1400
      %1403 = vst [vmem:[#allocation2 + $0x9] sm:$0xff] %v1401
      %v1404 = vld [vmem:[#allocation2] sm:$0xff]
      %v1405 = vld [vmem:[#allocation2 + $0x8] sm:$0xff]
      %v1406 = vld [vmem:[#allocation2 + $0x10] sm:$0x3]
      %v1407 = vld [vmem:[%s12] sm:$0xff]
      %v1408 = vld [vmem:[%s12 + $0x8] sm:$0xff]
      %v1409 = vld [vmem:[%s12 + $0x10] sm:$0xff]
      %v1410 = vld [vmem:[%s12 + $0x18] sm:$0xff]
      %v1411 = vld [vmem:[%s12 + $0x20] sm:$0xff]
      %v1412 = vld [vmem:[%s12 + $0x28] sm:$0xff]
      %v1413 = vld [vmem:[%s12 + $0x30] sm:$0xff]
      %v1414 = vld [vmem:[%s12 + $0x38] sm:$0xff]
      %v1415 = vld [vmem:[%s12 + $0x40] sm:$0xff]
      %v1416 = vld [vmem:[%s12 + $0x48] sm:$0xff]
      %v1417 = vld [vmem:[%s12 + $0x50] sm:$0xff]
      %v1418 = vld [vmem:[%s12 + $0x58] sm:$0xff]
      %v1419 = vld [vmem:[%s12 + $0x60] sm:$0xff]
      %v1420 = vld [vmem:[%s12 + $0x68] sm:$0xff]
      %v1421 = vld [vmem:[%s12 + $0x70] sm:$0xff]
      %v1422 = vld [vmem:[%s12 + $0x78] sm:$0xff]
      %s1423 = scalar_lea.vmem %s12, 128
      %v1424 = vld [vmem:[%s1423] sm:$0xff]
      %v1425 = vld [vmem:[%s1423 + $0x8] sm:$0xff]
      %v1426 = vld [vmem:[%s1423 + $0x10] sm:$0xff]
      %v1427 = vld [vmem:[%s1423 + $0x18] sm:$0xff]
      %v1428 = vld [vmem:[%s1423 + $0x20] sm:$0xff]
      %v1429 = vld [vmem:[%s1423 + $0x28] sm:$0xff]
      %v1430 = vld [vmem:[%s1423 + $0x30] sm:$0xff]
      %v1431 = vld [vmem:[%s1423 + $0x38] sm:$0xff]
      %v1432 = vld [vmem:[%s1423 + $0x40] sm:$0xff]
      %v1433 = vld [vmem:[%s1423 + $0x48] sm:$0xff]
      %v1434 = vld [vmem:[%s1423 + $0x50] sm:$0xff]
      %v1435 = vld [vmem:[%s1423 + $0x58] sm:$0xff]
      %v1436 = vld [vmem:[%s1423 + $0x60] sm:$0xff]
      %v1437 = vld [vmem:[%s1423 + $0x68] sm:$0xff]
      %v1438 = vld [vmem:[%s1423 + $0x70] sm:$0xff]
      %v1439 = vld [vmem:[%s1423 + $0x78] sm:$0xff]
      %v1443 = vrot.slane %v1404, 1
      %v1444 = vrot.slane %v1405, 1
      %v1445 = vsel %vm1131, %v1443, %v1444
      %v1446 = vrot.slane %v1406, 1
      %v1447 = vsel %vm1131, %v1444, %v1446
      %1450 = vmatprep.subr.mxu0 0.0
      %1451 = vmatpush1.msra.mxu0 %v1424
      %1452 = vmatprep.subr.mxu0 0.0
      %1453 = vmatpush1.msra.mxu0 %v1425
      %1454 = vmatprep.subr.mxu0 0.0
      %1455 = vmatpush1.msra.mxu0 %v1426
      %1456 = vmatprep.subr.mxu0 0.0
      %1457 = vmatpush1.msra.mxu0 %v1427
      %1458 = vmatprep.subr.mxu0 0.0
      %1459 = vmatpush1.msra.mxu0 %v1428
      %1460 = vmatprep.subr.mxu0 0.0
      %1461 = vmatpush1.msra.mxu0 %v1429
      %1462 = vmatprep.subr.mxu0 0.0
      %1463 = vmatpush1.msra.mxu0 %v1430
      %1464 = vmatprep.subr.mxu0 0.0
      %1465 = vmatpush1.msra.mxu0 %v1431
      %1466 = vmatprep.subr.mxu0 0.0
      %1467 = vmatpush1.msra.mxu0 %v1432
      %1468 = vmatprep.subr.mxu0 0.0
      %1469 = vmatpush1.msra.mxu0 %v1433
      %1470 = vmatprep.subr.mxu0 0.0
      %1471 = vmatpush1.msra.mxu0 %v1434
      %1472 = vmatprep.subr.mxu0 0.0
      %1473 = vmatpush1.msra.mxu0 %v1435
      %1474 = vmatprep.subr.mxu0 0.0
      %1475 = vmatpush1.msra.mxu0 %v1436
      %1476 = vmatprep.subr.mxu0 0.0
      %1477 = vmatpush1.msra.mxu0 %v1437
      %1478 = vmatprep.subr.mxu0 0.0
      %1479 = vmatpush1.msra.mxu0 %v1438
      %1480 = vmatprep.subr.mxu0 0.0
      %1481 = vmatpush1.msra.mxu0 %v1439
      %1482 = vmatprep.subr.mxu0 0.0
      %1483 = vmatpush1.msra.mxu0 0.0
      %1484 = vmatprep.subr.mxu0 0.0
      %1485 = vmatpush1.msra.mxu0 0.0
      %1486 = vmatprep.subr.mxu0 0.0
      %1487 = vmatpush1.msra.mxu0 0.0
      %1488 = vmatprep.subr.mxu0 0.0
      %1489 = vmatpush1.msra.mxu0 0.0
      %1490 = vmatprep.subr.mxu0 0.0
      %1491 = vmatpush1.msra.mxu0 0.0
      %1492 = vmatprep.subr.mxu0 0.0
      %1493 = vmatpush1.msra.mxu0 0.0
      %1494 = vmatprep.subr.mxu0 0.0
      %1495 = vmatpush1.msra.mxu0 0.0
      %1496 = vmatprep.subr.mxu0 0.0
      %1497 = vmatpush1.msra.mxu0 0.0
      %1498 = vmatprep.subr.mxu0 0.0
      %1499 = vmatpush1.msra.mxu0 0.0
      %1500 = vmatprep.subr.mxu0 0.0
      %1501 = vmatpush1.msra.mxu0 0.0
      %1502 = vmatprep.subr.mxu0 0.0
      %1503 = vmatpush1.msra.mxu0 0.0
      %1504 = vmatprep.subr.mxu0 0.0
      %1505 = vmatpush1.msra.mxu0 0.0
      %1506 = vmatprep.subr.mxu0 0.0
      %1507 = vmatpush1.msra.mxu0 0.0
      %1508 = vmatprep.subr.mxu0 0.0
      %1509 = vmatpush1.msra.mxu0 0.0
      %1510 = vmatprep.subr.mxu0 0.0
      %1511 = vmatpush1.msra.mxu0 0.0
      %1512 = vmatprep.subr.mxu0 0.0
      %1513 = vmatpush1.msra.mxu0 0.0
      %1514 = vmatprep.mubr.f32.mxu0 0.0
      %1515 = vmatmul.mubr.f32.gmra.mrb[0].mxu0 %v1445
      %v1516 = vpop.f32.mrb[0].mxu0
      %v1517 = vadd.f32 0.0, %v1516
      %v1518 = vpop.f32.mrb[0].mxu0
      %1519 = vmatprep.mubr.f32.mxu0 0.0
      %1520 = vmatmul.mubr.f32.gmra.mrb[0].mxu0 %v1447
      %v1521 = vpop.f32.mrb[0].mxu0
      %v1522 = vadd.f32 0.0, %v1521
      %v1523 = vpop.f32.mrb[0].mxu0
      %1524 = vdwg.mxu0
      %1525 = vmatprep.subr.mxu0 0.0
      %1526 = vmatpush1.msra.mxu0 %v1407
      %1527 = vmatprep.subr.mxu0 0.0
      %1528 = vmatpush1.msra.mxu0 %v1408
      %1529 = vmatprep.subr.mxu0 0.0
      %1530 = vmatpush1.msra.mxu0 %v1409
      %1531 = vmatprep.subr.mxu0 0.0
      %1532 = vmatpush1.msra.mxu0 %v1410
      %1533 = vmatprep.subr.mxu0 0.0
      %1534 = vmatpush1.msra.mxu0 %v1411
      %1535 = vmatprep.subr.mxu0 0.0
      %1536 = vmatpush1.msra.mxu0 %v1412
      %1537 = vmatprep.subr.mxu0 0.0
      %1538 = vmatpush1.msra.mxu0 %v1413
      %1539 = vmatprep.subr.mxu0 0.0
      %1540 = vmatpush1.msra.mxu0 %v1414
      %1541 = vmatprep.subr.mxu0 0.0
      %1542 = vmatpush1.msra.mxu0 %v1415
      %1543 = vmatprep.subr.mxu0 0.0
      %1544 = vmatpush1.msra.mxu0 %v1416
      %1545 = vmatprep.subr.mxu0 0.0
      %1546 = vmatpush1.msra.mxu0 %v1417
      %1547 = vmatprep.subr.mxu0 0.0
      %1548 = vmatpush1.msra.mxu0 %v1418
      %1549 = vmatprep.subr.mxu0 0.0
      %1550 = vmatpush1.msra.mxu0 %v1419
      %1551 = vmatprep.subr.mxu0 0.0
      %1552 = vmatpush1.msra.mxu0 %v1420
      %1553 = vmatprep.subr.mxu0 0.0
      %1554 = vmatpush1.msra.mxu0 %v1421
      %1555 = vmatprep.subr.mxu0 0.0
      %1556 = vmatpush1.msra.mxu0 %v1422
      %1557 = vmatprep.subr.mxu0 0.0
      %1558 = vmatpush1.msra.mxu0 0.0
      %1559 = vmatprep.subr.mxu0 0.0
      %1560 = vmatpush1.msra.mxu0 0.0
      %1561 = vmatprep.subr.mxu0 0.0
      %1562 = vmatpush1.msra.mxu0 0.0
      %1563 = vmatprep.subr.mxu0 0.0
      %1564 = vmatpush1.msra.mxu0 0.0
      %1565 = vmatprep.subr.mxu0 0.0
      %1566 = vmatpush1.msra.mxu0 0.0
      %1567 = vmatprep.subr.mxu0 0.0
      %1568 = vmatpush1.msra.mxu0 0.0
      %1569 = vmatprep.subr.mxu0 0.0
      %1570 = vmatpush1.msra.mxu0 0.0
      %1571 = vmatprep.subr.mxu0 0.0
      %1572 = vmatpush1.msra.mxu0 0.0
      %1573 = vmatprep.subr.mxu0 0.0
      %1574 = vmatpush1.msra.mxu0 0.0
      %1575 = vmatprep.subr.mxu0 0.0
      %1576 = vmatpush1.msra.mxu0 0.0
      %1577 = vmatprep.subr.mxu0 0.0
      %1578 = vmatpush1.msra.mxu0 0.0
      %1579 = vmatprep.subr.mxu0 0.0
      %1580 = vmatpush1.msra.mxu0 0.0
      %1581 = vmatprep.subr.mxu0 0.0
      %1582 = vmatpush1.msra.mxu0 0.0
      %1583 = vmatprep.subr.mxu0 0.0
      %1584 = vmatpush1.msra.mxu0 0.0
      %1585 = vmatprep.subr.mxu0 0.0
      %1586 = vmatpush1.msra.mxu0 0.0
      %1587 = vmatprep.subr.mxu0 0.0
      %1588 = vmatpush1.msra.mxu0 0.0
      %1589 = vmatprep.mubr.f32.mxu0 0.0
      %1590 = vmatmul.mubr.f32.gmra.mrb[0].mxu0 %v1404
      %v1591 = vpop.f32.mrb[0].mxu0
      %v1592 = vadd.f32 %v1517, %v1591
      %v1593 = vpop.f32.mrb[0].mxu0
      %1594 = vmatprep.mubr.f32.mxu0 0.0
      %1595 = vmatmul.mubr.f32.gmra.mrb[0].mxu0 %v1405
      %v1596 = vpop.f32.mrb[0].mxu0
      %v1597 = vadd.f32 %v1522, %v1596
      %v1598 = vpop.f32.mrb[0].mxu0
      %1599 = vdwg.mxu0
      %s1600 = scalar_lea.vmem %s12, 256
      %v1601 = vld [vmem:[%s1600] sm:$0xff]
      %v1602 = vld [vmem:[%s1600 + $0x8] sm:$0xff]
      %v1603 = vld [vmem:[%s1600 + $0x10] sm:$0xff]
      %v1604 = vld [vmem:[%s1600 + $0x18] sm:$0xff]
      %v1605 = vld [vmem:[%s1600 + $0x20] sm:$0xff]
      %v1606 = vld [vmem:[%s1600 + $0x28] sm:$0xff]
      %v1607 = vld [vmem:[%s1600 + $0x30] sm:$0xff]
      %v1608 = vld [vmem:[%s1600 + $0x38] sm:$0xff]
      %v1609 = vld [vmem:[%s1600 + $0x40] sm:$0xff]
      %v1610 = vld [vmem:[%s1600 + $0x48] sm:$0xff]
      %v1611 = vld [vmem:[%s1600 + $0x50] sm:$0xff]
      %v1612 = vld [vmem:[%s1600 + $0x58] sm:$0xff]
      %v1613 = vld [vmem:[%s1600 + $0x60] sm:$0xff]
      %v1614 = vld [vmem:[%s1600 + $0x68] sm:$0xff]
      %v1615 = vld [vmem:[%s1600 + $0x70] sm:$0xff]
      %v1616 = vld [vmem:[%s1600 + $0x78] sm:$0xff]
      %v1617 = vrot.slane %v1404, 2
      %v1618 = vrot.slane %v1405, 2
      %v1619 = vsel %vm1306, %v1617, %v1618
      %v1620 = vrot.slane %v1406, 2
      %v1621 = vsel %vm1306, %v1618, %v1620
      %1624 = vmatprep.subr.mxu0 0.0
      %1625 = vmatpush1.msra.mxu0 %v1601
      %1626 = vmatprep.subr.mxu0 0.0
      %1627 = vmatpush1.msra.mxu0 %v1602
      %1628 = vmatprep.subr.mxu0 0.0
      %1629 = vmatpush1.msra.mxu0 %v1603
      %1630 = vmatprep.subr.mxu0 0.0
      %1631 = vmatpush1.msra.mxu0 %v1604
      %1632 = vmatprep.subr.mxu0 0.0
      %1633 = vmatpush1.msra.mxu0 %v1605
      %1634 = vmatprep.subr.mxu0 0.0
      %1635 = vmatpush1.msra.mxu0 %v1606
      %1636 = vmatprep.subr.mxu0 0.0
      %1637 = vmatpush1.msra.mxu0 %v1607
      %1638 = vmatprep.subr.mxu0 0.0
      %1639 = vmatpush1.msra.mxu0 %v1608
      %1640 = vmatprep.subr.mxu0 0.0
      %1641 = vmatpush1.msra.mxu0 %v1609
      %1642 = vmatprep.subr.mxu0 0.0
      %1643 = vmatpush1.msra.mxu0 %v1610
      %1644 = vmatprep.subr.mxu0 0.0
      %1645 = vmatpush1.msra.mxu0 %v1611
      %1646 = vmatprep.subr.mxu0 0.0
      %1647 = vmatpush1.msra.mxu0 %v1612
      %1648 = vmatprep.subr.mxu0 0.0
      %1649 = vmatpush1.msra.mxu0 %v1613
      %1650 = vmatprep.subr.mxu0 0.0
      %1651 = vmatpush1.msra.mxu0 %v1614
      %1652 = vmatprep.subr.mxu0 0.0
      %1653 = vmatpush1.msra.mxu0 %v1615
      %1654 = vmatprep.subr.mxu0 0.0
      %1655 = vmatpush1.msra.mxu0 %v1616
      %1656 = vmatprep.subr.mxu0 0.0
      %1657 = vmatpush1.msra.mxu0 0.0
      %1658 = vmatprep.subr.mxu0 0.0
      %1659 = vmatpush1.msra.mxu0 0.0
      %1660 = vmatprep.subr.mxu0 0.0
      %1661 = vmatpush1.msra.mxu0 0.0
      %1662 = vmatprep.subr.mxu0 0.0
      %1663 = vmatpush1.msra.mxu0 0.0
      %1664 = vmatprep.subr.mxu0 0.0
      %1665 = vmatpush1.msra.mxu0 0.0
      %1666 = vmatprep.subr.mxu0 0.0
      %1667 = vmatpush1.msra.mxu0 0.0
      %1668 = vmatprep.subr.mxu0 0.0
      %1669 = vmatpush1.msra.mxu0 0.0
      %1670 = vmatprep.subr.mxu0 0.0
      %1671 = vmatpush1.msra.mxu0 0.0
      %1672 = vmatprep.subr.mxu0 0.0
      %1673 = vmatpush1.msra.mxu0 0.0
      %1674 = vmatprep.subr.mxu0 0.0
      %1675 = vmatpush1.msra.mxu0 0.0
      %1676 = vmatprep.subr.mxu0 0.0
      %1677 = vmatpush1.msra.mxu0 0.0
      %1678 = vmatprep.subr.mxu0 0.0
      %1679 = vmatpush1.msra.mxu0 0.0
      %1680 = vmatprep.subr.mxu0 0.0
      %1681 = vmatpush1.msra.mxu0 0.0
      %1682 = vmatprep.subr.mxu0 0.0
      %1683 = vmatpush1.msra.mxu0 0.0
      %1684 = vmatprep.subr.mxu0 0.0
      %1685 = vmatpush1.msra.mxu0 0.0
      %1686 = vmatprep.subr.mxu0 0.0
      %1687 = vmatpush1.msra.mxu0 0.0
      %1688 = vmatprep.mubr.f32.mxu0 0.0
      %1689 = vmatmul.mubr.f32.gmra.mrb[0].mxu0 %v1619
      %v1690 = vpop.f32.mrb[0].mxu0
      %v1691 = vadd.f32 0.0, %v1690
      %v1692 = vpop.f32.mrb[0].mxu0
      %1693 = vmatprep.mubr.f32.mxu0 0.0
      %1694 = vmatmul.mubr.f32.gmra.mrb[0].mxu0 %v1621
      %v1695 = vpop.f32.mrb[0].mxu0
      %v1696 = vadd.f32 0.0, %v1695
      %v1697 = vpop.f32.mrb[0].mxu0
      %1698 = vdwg.mxu0
      %v1699 = vadd.f32 %v1592, %v1691
      %v1700 = vadd.f32 %v1597, %v1696
      %v1701 = vld [vmem:[%s13] sm:$0x1]
      %v1703 = vlaneseq
      %v1704 = vshrl.u32 %v1703, 7
      %v1705 = vsub.s32 0, %v1704
      %v1706 = vrot.slane %v1701, %v1705
      %v1708 = vadd.f32 %v1699, %v1706
      %v1709 = vadd.f32 %v1700, %v1706
      %v1710 = vxor.u32 %v1708, 2147483648
      %v1711 = vxor.u32 %v1709, 2147483648
      %v1712 = vmul.f32 %v1710, 1.442695
      %v1713 = vpow.pop %v1712
      %v1714 = vmul.f32 %v1711, 1.442695
      %v1715 = vpow.pop %v1714
      %v1716 = vadd.f32 %v1713, 1.0
      %v1717 = vadd.f32 %v1715, 1.0
      %v1718 = vrcp.pop %v1716
      %v1719 = vmul.f32 1.0, %v1718
      %v1720 = vrcp.pop %v1717
      %v1721 = vmul.f32 1.0, %v1720
      %v1722 = vld [vmem:[%s479] sm:$0xff]
      %v1723 = vld [vmem:[%s479 + $0x8] sm:$0xff]
      %v1724 = vmul.f32 %v1722, %v1719
      %v1725 = vmul.f32 %v1723, %v1721
      %1726 = vst.msk [vmem:[%s484] sm:$0xff] %vm606, %v1719
      %1727 = vst.msk [vmem:[%s484 + $0x8] sm:$0xff] %vm606, %v1721
      %1730 = vrot.lane.b32.xlu0 %v1724, 32
      %v1731 = vpop.permute.xlu0 %1730
      %1732 = vrot.lane.b32.xlu0 %v1725, 32
      %v1733 = vpop.permute.xlu0 %1732
      %vm1736 = vcmask 523520
      %1737 = vst.msk [vmem:[%s484] sm:$0xff] %vm1736, %v1731
      %1738 = vst.msk [vmem:[%s484 + $0x8] sm:$0xff] %vm1736, %v1733
      %p1739 = scmp.lt.s32.totalorder %s25, 1
      %s1740 = scalar_select %p1739, %s25, 1
      %s1741 = smul.addr %s1740, 2
      %s1742 = smul.addr %s1741, 8
      %s1743 = scalar_lea.vmem %s14, %s1742
      // Predicated region
      $region77: #{cnn_autoencoder_forward.1} parent=75 // pred_check
        %p1744 = pneg %p347
      $region78: #{cnn_autoencoder_forward.1} parent=75 // pred_check_branch
        %1746 = sbr.rel (%p1744) target = $region80
      $region79: #{cnn_autoencoder_forward.1} parent=75 // pred_region
        _
      $region80: #{cnn_autoencoder_forward.1} parent=75 // pred_fallthru
        _
    $region76: #{cnn_autoencoder_forward.1} parent=5 // pred_fallthru
      _
    %p1747 = scmp.le.s32.totalorder 2, %s20
    // Predicated region
    $region81: #{cnn_autoencoder_forward.1} parent=5 // pred_check
      %p1748 = pneg %p1747
    $region82: #{cnn_autoencoder_forward.1} parent=5 // pred_check_branch
      %1750 = sbr.rel (%p1748) target = $region84
    $region83: #{cnn_autoencoder_forward.1} parent=5 // pred_region
      %s1751 = ssub.s32 %s20, 2
      // Predicated region
      $region85: #{cnn_autoencoder_forward.1} parent=83 // pred_check
        %p1752 = pneg %p353
      $region86: #{cnn_autoencoder_forward.1} parent=83 // pred_check_branch
        %1754 = sbr.rel (%p1752) target = $region88
      $region87: #{cnn_autoencoder_forward.1} parent=83 // pred_region
        %p1755 = scmp.lt.s32.totalorder %s26, 1
        %s1756 = scalar_select %p1755, %s26, 1
        %s1757 = smul.addr %s1756, 2
        %s1758 = smul.addr %s1757, 8
        %s1759 = scalar_lea.vmem %s14, %s1758
      $region88: #{cnn_autoencoder_forward.1} parent=83 // pred_fallthru
        _
    $region84: #{cnn_autoencoder_forward.1} parent=5 // pred_fallthru
      _
  $region6: #{cnn_autoencoder_forward.1} parent=0 // loop_footer
    %s24 = sadd.s32 1, %s20
  $region7: #{cnn_autoencoder_forward.1} parent=0 // loop_footer_branch
    %19 = sbr.rel target = $region3
  $region8: #{cnn_autoencoder_forward.1} parent=0 // loop_exit
    _

</llo_original>
